<compile_context>
chip_gen: v5e
topology: v5e:2x2
jax: 0.10.0
libtpu: 0.0.40
codegen_flags: <defaults>
</compile_context>

<pallas_src>
import math

import jax
import jax.numpy as jnp
from jax import lax
from jax.experimental import pallas as pl
from jax.experimental.pallas import tpu as pltpu

_INV_SQRT2 = 0.7071067811865476


def _transition_kernel(x_ref, scale_ref, shift_ref, w_ref, b_ref, o_ref):
    # x_ref:     (1, C_in, TL)      one (batch, L-tile) block in NCL layout
    # scale_ref: (C_in, 1)          folded BN scale = gamma / sqrt(var + eps)
    # shift_ref: (C_in, 1)          folded BN shift = beta - mean * scale
    # w_ref:     (C_in, C_out)      conv1x1 weight, transposed (f32 or bf16)
    # b_ref:     (1, C_out)         conv bias (f32)
    # o_ref:     (1, C_out, TL//2)  output block in NCL layout
    x = x_ref[0]                                               # (C_in, TL)

    # BatchNorm (eval, folded) + exact erf GELU — elementwise in the lane-dense
    # (C_in, TL) layout (sequence positions on the 128-lane axis).
    xn = x * scale_ref[...] + shift_ref[...]
    act = 0.5 * xn * (1.0 + lax.erf(xn * _INV_SQRT2))

    # 1x1 Conv == per-position channel contraction on the MXU.  dot_general with the
    # LHS contracting on dim 0 avoids materializing a (C_in, TL) -> (TL, C_in)
    # transpose; result is (TL, C_out) with an f32 accumulator.
    y = lax.dot_general(act.astype(w_ref.dtype), w_ref[...],
                        dimension_numbers=(((0,), (0,)), ((), ())),
                        preferred_element_type=jnp.float32)

    # MaxPool1d(kernel=2, stride=2) over the sequence (sublane) axis, then the bias
    # add (exact: max(a+b, c+b) == max(a, c) + b -> half the bias VALU work, one
    # fewer (TL, C_out) temporary).
    tl_half = o_ref.shape[2]
    yp = jnp.max(y.reshape(tl_half, 2, y.shape[-1]), axis=1)   # (TL//2, C_out)
    yp = yp + b_ref[...]

    # Store back in NCL layout (C_out on sublanes, pooled L on lanes): lane-dense
    # output block, so the wrapper needs no HBM transpose.  This transpose is the
    # only per-step XLU work left.
    o_ref[0] = jnp.transpose(yp, (1, 0)).astype(o_ref.dtype)


def _vmem_capacity_bytes():
    """Generation-aware VMEM size; conservative fallback (v7x per-core)."""
    try:
        info = pltpu.get_tpu_info()
        cap = getattr(info, "vmem_capacity_bytes", None)
        if cap:
            return int(cap)
    except Exception:
        pass
    return 64 * 1024 * 1024


def _pick_tile_l(length, c_in, c_out, budget_bytes, max_tile_l):
    """Largest multiple-of-256 sequence tile whose per-step VMEM footprint
    (double-buffered in/out blocks PLUS in-kernel intermediates) fits the budget.

    The grid uses cdiv, so TL does not need to divide L: Pallas pads OOB reads and
    masks OOB writes of the last tile.  This is exact here because each surviving
    pooled output position j depends only on the in-bounds inputs 2j, 2j+1.
    """
    if length <= 256:
        return length
    # Per sequence position, f32 bytes:
    #   2x input buffers             : 2 * C_in * 4
    #   2x (half-length) out buffers :     C_out * 4
    #   act / normalized temp        :     C_in  * 4
    #   y + pooled/transposed temps  : ~2 * C_out * 4
    bytes_per_l = 4 * (3 * c_in + 3 * c_out)
    cap = min(budget_bytes // bytes_per_l, int(max_tile_l), int(length))
    tl = (cap // 256) * 256
    return max(tl, 256)


def transition_block(x, gamma, beta, running_mean, running_var, w, b,
                     eps=1e-5, max_tile_l=8192, matmul_dtype=None):
    """x: (N, C_in, L) float32 -> (N, C_out, L//2) float32.

    matmul_dtype: set to jnp.bfloat16 on v6e/v7x when C_in*C_out is large enough for
    the matmul to matter (~2x MXU throughput, f32 accumulate kept).  Default None
    keeps exact f32 numerics (recommended on v5e / small channel counts).
    """
    n, c_in, length = x.shape
    c_out = w.shape[0]
    assert length % 2 == 0, "MaxPool1d(2,2) requires an even sequence length"

    # Fold BatchNorm (inference) into per-channel scale/shift.
    scale = gamma / jnp.sqrt(running_var + eps)
    shift = beta - running_mean * scale

    # Scoped VMEM limit, generation aware: 64 MiB on 128-MiB parts (v5e/v6e), ~44 MiB
    # on 64-MiB v7x (headroom for compiler scratch).  The tile budget is derived from
    # the limit actually set so the two stay consistent.
    phys = _vmem_capacity_bytes()
    if phys >= 128 * 1024 * 1024:
        vmem_limit = 64 * 1024 * 1024
    else:
        vmem_limit = max(32 * 1024 * 1024,
                         min(phys - 20 * 1024 * 1024, 44 * 1024 * 1024))
    tile_budget = (vmem_limit * 3) // 5

    tl = _pick_tile_l(length, c_in, c_out, tile_budget, max_tile_l)
    num_l_tiles = pl.cdiv(length, tl)

    w_t = jnp.transpose(w, (1, 0)).astype(
        matmul_dtype if matmul_dtype is not None else x.dtype)

    out = pl.pallas_call(
        _transition_kernel,
        out_shape=jax.ShapeDtypeStruct((n, c_out, length // 2), x.dtype),
        grid=(n, num_l_tiles),
        in_specs=[
            pl.BlockSpec((1, c_in, tl), lambda i, l: (i, 0, l)),
            pl.BlockSpec((c_in, 1), lambda i, l: (0, 0)),
            pl.BlockSpec((c_in, 1), lambda i, l: (0, 0)),
            pl.BlockSpec((c_in, c_out), lambda i, l: (0, 0)),
            pl.BlockSpec((1, c_out), lambda i, l: (0, 0)),
        ],
        out_specs=pl.BlockSpec((1, c_out, tl // 2), lambda i, l: (i, 0, l)),
        compiler_params=pltpu.CompilerParams(
            dimension_semantics=("parallel", "parallel"),
            vmem_limit_bytes=vmem_limit),
    )(x,
      scale.reshape(c_in, 1).astype(x.dtype),
      shift.reshape(c_in, 1).astype(x.dtype),
      w_t,
      b.reshape(1, c_out).astype(jnp.float32))

    return out                                                  # (N, C_out, L//2)


def _reference(x, gamma, beta, mean, var, w, b, eps=1e-5):
    xn = (x - mean[None, :, None]) / jnp.sqrt(var[None, :, None] + eps)
    xn = xn * gamma[None, :, None] + beta[None, :, None]
    act = 0.5 * xn * (1.0 + lax.erf(xn / math.sqrt(2.0)))
    y = jnp.einsum("oc,ncl->nol", w, act) + b[None, :, None]
    n, co, length = y.shape
    return jnp.max(y.reshape(n, co, length // 2, 2), axis=-1)


if __name__ == "__main__":
    N, C_IN, C_OUT, L = 2, 8, 16, 1024

    key = jax.random.PRNGKey(0)
    kx, kg, kb, km, kv, kw, kc = jax.random.split(key, 7)

    x = jax.random.normal(kx, (N, C_IN, L), dtype=jnp.float32)

    # Deterministic synthetic parameters (BatchNorm1d + Conv1d(k=1)).
    gamma = jax.random.normal(kg, (C_IN,), dtype=jnp.float32) * 0.1 + 1.0
    beta = jax.random.normal(kb, (C_IN,), dtype=jnp.float32) * 0.1
    running_mean = jax.random.normal(km, (C_IN,), dtype=jnp.float32) * 0.1
    running_var = jax.random.uniform(kv, (C_IN,), dtype=jnp.float32,
                                     minval=0.5, maxval=1.5)
    w = jax.random.normal(kw, (C_OUT, C_IN), dtype=jnp.float32) / math.sqrt(C_IN)
    b = jax.random.normal(kc, (C_OUT,), dtype=jnp.float32) * 0.1

    # 1) Evenly-divisible case; max_tile_l=256 forces the L-tiled path
    #    (grid = (N, L // 256)) even at this small test size.
    out = transition_block(x, gamma, beta, running_mean, running_var, w, b,
                           max_tile_l=256)
    out = jax.block_until_ready(out)
    ref = _reference(x, gamma, beta, running_mean, running_var, w, b)
    assert out.shape == (N, C_OUT, L // 2), out.shape
    assert jnp.allclose(out, ref, atol=1e-4, rtol=1e-5), \
        float(jnp.max(jnp.abs(out - ref)))

    # 2) Ragged case (L not a multiple of the tile): exercises the cdiv grid with a
    #    masked partial tail tile.
    L2 = 640
    x2 = jax.random.normal(jax.random.PRNGKey(1), (N, C_IN, L2), dtype=jnp.float32)
    out2 = transition_block(x2, gamma, beta, running_mean, running_var, w, b,
                            max_tile_l=256)
    out2 = jax.block_until_ready(out2)
    ref2 = _reference(x2, gamma, beta, running_mean, running_var, w, b)
    assert out2.shape == (N, C_OUT, L2 // 2), out2.shape
    assert jnp.allclose(out2, ref2, atol=1e-4, rtol=1e-5), \
        float(jnp.max(jnp.abs(out2 - ref2)))

    print("KERNEL_OK")
</pallas_src>

<mosaic_0001>
module attributes {stable_mosaic.version = 11 : i64} {
  func.func @_transition_kernel(%arg0: i32, %arg1: i32, %arg2: memref<1x8x256xf32, #tpu.memory_space<vmem>>, %arg3: memref<8x1xf32, #tpu.memory_space<vmem>>, %arg4: memref<8x1xf32, #tpu.memory_space<vmem>>, %arg5: memref<8x16xf32, #tpu.memory_space<vmem>>, %arg6: memref<1x16xf32, #tpu.memory_space<vmem>>, %arg7: memref<1x16x128xf32, #tpu.memory_space<vmem>>) attributes {dimension_semantics = [#tpu.dimension_semantics<parallel>, #tpu.dimension_semantics<parallel>], iteration_bounds = array<i64: 2, 4>, scalar_prefetch = 0 : i64, scratch_operands = 0 : i64, tpu.core_type = #tpu.core_type<tc>, window_params = [{transform_indices = @transform_0, window_bounds = array<i64: 1, 8, 256>}, {pipeline_mode = #tpu.pipeline_mode<synchronous>, transform_indices = @transform_1, window_bounds = array<i64: 8, 1>}, {pipeline_mode = #tpu.pipeline_mode<synchronous>, transform_indices = @transform_2, window_bounds = array<i64: 8, 1>}, {pipeline_mode = #tpu.pipeline_mode<synchronous>, transform_indices = @transform_3, window_bounds = array<i64: 8, 16>}, {pipeline_mode = #tpu.pipeline_mode<synchronous>, transform_indices = @transform_4, window_bounds = array<i64: 1, 16>}, {transform_indices = @transform_5, window_bounds = array<i64: 1, 16, 128>}]} {
    %c0 = arith.constant 0 : index
    %c0_0 = arith.constant 0 : index
    %c0_1 = arith.constant 0 : index
    %0 = vector.load %arg2[%c0, %c0_0, %c0_1] : memref<1x8x256xf32, #tpu.memory_space<vmem>>, vector<1x8x256xf32>
    %1 = vector.shape_cast %0 : vector<1x8x256xf32> to vector<8x256xf32>
    %c0_2 = arith.constant 0 : index
    %c0_3 = arith.constant 0 : index
    %2 = vector.load %arg3[%c0_2, %c0_3] : memref<8x1xf32, #tpu.memory_space<vmem>>, vector<8x1xf32>
    %3 = vector.broadcast %2 : vector<8x1xf32> to vector<8x256xf32>
    %4 = arith.mulf %1, %3 : vector<8x256xf32>
    %c0_4 = arith.constant 0 : index
    %c0_5 = arith.constant 0 : index
    %5 = vector.load %arg4[%c0_4, %c0_5] : memref<8x1xf32, #tpu.memory_space<vmem>>, vector<8x1xf32>
    %6 = vector.broadcast %5 : vector<8x1xf32> to vector<8x256xf32>
    %7 = arith.addf %4, %6 : vector<8x256xf32>
    %cst = arith.constant 5.000000e-01 : f32
    %8 = vector.broadcast %cst : f32 to vector<8x256xf32>
    %9 = arith.mulf %8, %7 : vector<8x256xf32>
    %cst_6 = arith.constant 0.707106769 : f32
    %10 = vector.broadcast %cst_6 : f32 to vector<8x256xf32>
    %11 = arith.mulf %7, %10 : vector<8x256xf32>
    %12 = math.erf %11 : vector<8x256xf32>
    %cst_7 = arith.constant 1.000000e+00 : f32
    %13 = vector.broadcast %cst_7 : f32 to vector<8x256xf32>
    %14 = arith.addf %13, %12 : vector<8x256xf32>
    %15 = arith.mulf %9, %14 : vector<8x256xf32>
    %c0_8 = arith.constant 0 : index
    %c0_9 = arith.constant 0 : index
    %16 = vector.load %arg5[%c0_8, %c0_9] : memref<8x16xf32, #tpu.memory_space<vmem>>, vector<8x16xf32>
    %cst_10 = arith.constant dense<0.000000e+00> : vector<256x16xf32>
    %17 = tpu.matmul %15, %16, %cst_10 {dimension_numbers = #tpu.dot_dimension_numbers<[0], [0], [1], [1], [0, 1, 1, 1], [], []>} : vector<8x256xf32>, vector<8x16xf32>, vector<256x16xf32> -> vector<256x16xf32>
    %18 = vector.shape_cast %17 : vector<256x16xf32> to vector<128x2x16xf32>
    %cst_11 = arith.constant dense<0xFF800000> : vector<128x16xf32>
    %19 = vector.multi_reduction <maximumf>, %18, %cst_11 [1] : vector<128x2x16xf32> to vector<128x16xf32>
    %c0_12 = arith.constant 0 : index
    %c0_13 = arith.constant 0 : index
    %20 = vector.load %arg6[%c0_12, %c0_13] : memref<1x16xf32, #tpu.memory_space<vmem>>, vector<1x16xf32>
    %21 = vector.broadcast %20 : vector<1x16xf32> to vector<128x16xf32>
    %22 = arith.addf %19, %21 : vector<128x16xf32>
    %23 = tpu.transpose %22, [1, 0] : vector<128x16xf32> -> vector<16x128xf32>
    %c0_14 = arith.constant 0 : index
    %c0_15 = arith.constant 0 : index
    %c0_16 = arith.constant 0 : index
    %24 = vector.load %arg7[%c0_14, %c0_15, %c0_16] : memref<1x16x128xf32, #tpu.memory_space<vmem>>, vector<1x16x128xf32>
    %25 = vector.shape_cast %24 : vector<1x16x128xf32> to vector<16x128xf32>
    %26 = vector.shape_cast %23 : vector<16x128xf32> to vector<1x16x128xf32>
    tpu.vector_store %arg7[%c0_14, %c0_15, %c0_16], %26 {strides = array<i32>} : memref<1x16x128xf32, #tpu.memory_space<vmem>>, vector<1x16x128xf32>,
    return
  }
  func.func @transform_0(%arg0: i32, %arg1: i32) -> (i32, i32, i32) {
    %c0_i32 = arith.constant 0 : i32
    %c0_i32_0 = arith.constant 0 : i32
    return %arg0, %c0_i32, %arg1 : i32, i32, i32
  }
  func.func @transform_1(%arg0: i32, %arg1: i32) -> (i32, i32) {
    %c0_i32 = arith.constant 0 : i32
    %c0_i32_0 = arith.constant 0 : i32
    %c0_i32_1 = arith.constant 0 : i32
    return %c0_i32, %c0_i32_0 : i32, i32
  }
  func.func @transform_2(%arg0: i32, %arg1: i32) -> (i32, i32) {
    %c0_i32 = arith.constant 0 : i32
    %c0_i32_0 = arith.constant 0 : i32
    %c0_i32_1 = arith.constant 0 : i32
    return %c0_i32, %c0_i32_0 : i32, i32
  }
  func.func @transform_3(%arg0: i32, %arg1: i32) -> (i32, i32) {
    %c0_i32 = arith.constant 0 : i32
    %c0_i32_0 = arith.constant 0 : i32
    %c0_i32_1 = arith.constant 0 : i32
    return %c0_i32, %c0_i32_0 : i32, i32
  }
  func.func @transform_4(%arg0: i32, %arg1: i32) -> (i32, i32) {
    %c0_i32 = arith.constant 0 : i32
    %c0_i32_0 = arith.constant 0 : i32
    %c0_i32_1 = arith.constant 0 : i32
    return %c0_i32, %c0_i32_0 : i32, i32
  }
  func.func @transform_5(%arg0: i32, %arg1: i32) -> (i32, i32, i32) {
    %c0_i32 = arith.constant 0 : i32
    %c0_i32_0 = arith.constant 0 : i32
    return %arg0, %c0_i32, %arg1 : i32, i32, i32
  }
}

</mosaic_0001>

<llo_original>
// kernel: tpu_custom_call.1
$region0: #{tpu_custom_call.1}
  #allocation0 [shape = 'u32[]', space=smem, size = 0x4, offset = 0x4, fixed_abs, tag = 'smem constant byte address 0x4 - core index']
  #allocation1 [shape = 'u32[72,128]{1,0:T(1,128)}', space=vmem, size = 0x9000, scoped, tag = 'internal scratch']
  %s0 = inlined_call_operand.hbm [shape: f32[2,8,1024], index: 0, kind: input, shape index: {}]
  %s1 = inlined_call_operand.vmem [shape: f32[8,1], index: 1, kind: input, shape index: {}]
  %s2 = inlined_call_operand.vmem [shape: f32[8,1], index: 2, kind: input, shape index: {}]
  %s3 = inlined_call_operand.vmem [shape: f32[8,16], index: 3, kind: input, shape index: {}]
  %s4 = inlined_call_operand.vmem [shape: f32[1,16], index: 4, kind: input, shape index: {}]
  %s5 = inlined_call_operand.hbm [shape: f32[2,16,512], index: 5, kind: output, shape index: {}]
  %s6 = sld [smem:[#allocation0]]
  $region57: #{tpu_custom_call.1} parent=0
    _
  %s8 = ssub.s32 1, %s6
  %s9 = scalar_select 0, %s8, %s6
  $region1: #{tpu_custom_call.1} parent=0
    #allocation2 [shape = 'u8[16384]{0}', space=vmem, size = 0x4000, scoped, tag = 'input window, operand 0']
    #allocation3 [shape = 's32[2]{0}', space=sflag, size = 0x8, scoped, tag = 'scoped memory for tpu_custom_call.1']
    #allocation4 [shape = 's32[2]{0}', space=sflag, size = 0x8, scoped, tag = 'scoped memory for tpu_custom_call.1']
    #allocation5 [shape = 'u8[16384]{0}', space=vmem, size = 0x4000, scoped, tag = 'output window, operand 0']
    %10 = vsyncpa [#allocation3], 0
    %s11 = scalar_lea.sflag [#allocation3], 1
    %12 = vsyncpa %s11, 0
    %13 = vsyncpa [#allocation4], 0
    %s14 = scalar_lea.sflag [#allocation4], 1
    %15 = vsyncpa %s14, 0
    loop: start=0, step=1, limit=10
    $region2: #{tpu_custom_call.1} parent=1 // loop_pre_header
      _
    $region3: #{tpu_custom_call.1} parent=1 // loop_header
      %s17 = sphi 0, %s21
      %p18 = scmp.ge.s32.totalorder %s17, 10
      %s24 = sphi 0, %s36
      %s25 = sphi 0, %s32
      %s26 = sphi 0, %s24
      %s27 = sphi 0, %s25
      %s28 = sphi 0, %s26
      %s29 = sphi 0, %s27
      %s41 = sphi 0, %s43
      %s44 = sphi 0, %s41
      %s45 = sphi 0, %s44
      %s61 = sphi 0, %s45
      %s65 = sphi 0, %s65
      %s67 = sphi 0, %s65
      %s68 = sphi 0, %s67
      %s82 = sphi 0, %s68
      %s86 = sphi 0, %s86
      %s88 = sphi 0, %s86
      %s89 = sphi 0, %s88
      %s103 = sphi 0, %s89
      %s107 = sphi 0, %s107
      %s109 = sphi 0, %s107
      %s110 = sphi 0, %s109
      %s124 = sphi 0, %s110
      %s128 = sphi 0, %s128
      %s130 = sphi 0, %s128
      %s131 = sphi 0, %s130
      %s145 = sphi 0, %s131
      %s153 = sphi 0, %s155
      %s156 = sphi 0, %s153
      %s157 = sphi 0, %s156
      %s173 = sphi 0, %s157
    $region4: #{tpu_custom_call.1} parent=1 // loop_header_branch
      %20 = sbr.rel (%p18) target = $region8
    $region5: #{tpu_custom_call.1} parent=1 // loop_body
      %s22 = ssub.s32 %s17, 1
      %s23 = ssub.s32 %s17, 2
      %s30 = sadd.s32 1, %s25
      %p31 = scmp.ge.s32.totalorder %s30, 4
      %s32 = scalar_select %p31, 0, %s30
      %s33 = sadd.s32 1, %s24
      %s34 = scalar_select %p31, %s33, %s24
      %p35 = scmp.ge.s32.totalorder %s34, 2
      %s36 = scalar_select %p35, 0, %s34
      %s37 = ssub.s32 %s24, %s36
      %s38 = ssub.s32 %s25, %s32
      %s39 = sor.u32 %s37, %s38
      %p40 = scmp.eq.s32.totalorder %s39, 0
      %s42 = sadd.s32 %s41, 1
      %s43 = scalar_select %p40, %s41, %s42
      %p46 = pneg %p40
      %p47 = scmp.eq.s32.totalorder %s17, 7
      %p48 = por %p46, %p47
      %p49 = scmp.ne.s32.totalorder %s41, %s44
      %p50 = scmp.eq.s32.totalorder %s17, 0
      %p51 = por %p49, %p50
      %p52 = scmp.ne.s32.totalorder %s41, %s44
      %p53 = scmp.eq.s32.totalorder %s22, 7
      %p54 = por %p52, %p53
      %p55 = scmp.ne.s32.totalorder %s44, %s45
      %p56 = scmp.eq.s32.totalorder %s22, 0
      %p57 = por %p55, %p56
      %p58 = scmp.ne.s32.totalorder %s44, %s45
      %p59 = scmp.eq.s32.totalorder %s23, 7
      %p60 = por %p58, %p59
      %p62 = scmp.ne.s32.totalorder %s45, %s61
      %p63 = scmp.eq.s32.totalorder %s23, 0
      %p64 = por %p62, %p63
      %s66 = sadd.s32 %s65, 1
      %p69 = scmp.eq.s32.totalorder %s17, 7
      %p70 = scmp.ne.s32.totalorder %s65, %s67
      %p71 = scmp.eq.s32.totalorder %s17, 0
      %p72 = por %p70, %p71
      %p73 = scmp.ne.s32.totalorder %s65, %s67
      %p74 = scmp.eq.s32.totalorder %s22, 7
      %p75 = por %p73, %p74
      %p76 = scmp.ne.s32.totalorder %s67, %s68
      %p77 = scmp.eq.s32.totalorder %s22, 0
      %p78 = por %p76, %p77
      %p79 = scmp.ne.s32.totalorder %s67, %s68
      %p80 = scmp.eq.s32.totalorder %s23, 7
      %p81 = por %p79, %p80
      %p83 = scmp.ne.s32.totalorder %s68, %s82
      %p84 = scmp.eq.s32.totalorder %s23, 0
      %p85 = por %p83, %p84
      %s87 = sadd.s32 %s86, 1
      %p90 = scmp.eq.s32.totalorder %s17, 7
      %p91 = scmp.ne.s32.totalorder %s86, %s88
      %p92 = scmp.eq.s32.totalorder %s17, 0
      %p93 = por %p91, %p92
      %p94 = scmp.ne.s32.totalorder %s86, %s88
      %p95 = scmp.eq.s32.totalorder %s22, 7
      %p96 = por %p94, %p95
      %p97 = scmp.ne.s32.totalorder %s88, %s89
      %p98 = scmp.eq.s32.totalorder %s22, 0
      %p99 = por %p97, %p98
      %p100 = scmp.ne.s32.totalorder %s88, %s89
      %p101 = scmp.eq.s32.totalorder %s23, 7
      %p102 = por %p100, %p101
      %p104 = scmp.ne.s32.totalorder %s89, %s103
      %p105 = scmp.eq.s32.totalorder %s23, 0
      %p106 = por %p104, %p105
      %s108 = sadd.s32 %s107, 1
      %p111 = scmp.eq.s32.totalorder %s17, 7
      %p112 = scmp.ne.s32.totalorder %s107, %s109
      %p113 = scmp.eq.s32.totalorder %s17, 0
      %p114 = por %p112, %p113
      %p115 = scmp.ne.s32.totalorder %s107, %s109
      %p116 = scmp.eq.s32.totalorder %s22, 7
      %p117 = por %p115, %p116
      %p118 = scmp.ne.s32.totalorder %s109, %s110
      %p119 = scmp.eq.s32.totalorder %s22, 0
      %p120 = por %p118, %p119
      %p121 = scmp.ne.s32.totalorder %s109, %s110
      %p122 = scmp.eq.s32.totalorder %s23, 7
      %p123 = por %p121, %p122
      %p125 = scmp.ne.s32.totalorder %s110, %s124
      %p126 = scmp.eq.s32.totalorder %s23, 0
      %p127 = por %p125, %p126
      %s129 = sadd.s32 %s128, 1
      %p132 = scmp.eq.s32.totalorder %s17, 7
      %p133 = scmp.ne.s32.totalorder %s128, %s130
      %p134 = scmp.eq.s32.totalorder %s17, 0
      %p135 = por %p133, %p134
      %p136 = scmp.ne.s32.totalorder %s128, %s130
      %p137 = scmp.eq.s32.totalorder %s22, 7
      %p138 = por %p136, %p137
      %p139 = scmp.ne.s32.totalorder %s130, %s131
      %p140 = scmp.eq.s32.totalorder %s22, 0
      %p141 = por %p139, %p140
      %p142 = scmp.ne.s32.totalorder %s130, %s131
      %p143 = scmp.eq.s32.totalorder %s23, 7
      %p144 = por %p142, %p143
      %p146 = scmp.ne.s32.totalorder %s131, %s145
      %p147 = scmp.eq.s32.totalorder %s23, 0
      %p148 = por %p146, %p147
      %s149 = ssub.s32 %s24, %s36
      %s150 = ssub.s32 %s25, %s32
      %s151 = sor.u32 %s149, %s150
      %p152 = scmp.eq.s32.totalorder %s151, 0
      %s154 = sadd.s32 %s153, 1
      %s155 = scalar_select %p152, %s153, %s154
      %p158 = pneg %p152
      %p159 = scmp.eq.s32.totalorder %s17, 7
      %p160 = por %p158, %p159
      %p161 = scmp.ne.s32.totalorder %s153, %s156
      %p162 = scmp.eq.s32.totalorder %s17, 0
      %p163 = por %p161, %p162
      %p164 = scmp.ne.s32.totalorder %s153, %s156
      %p165 = scmp.eq.s32.totalorder %s22, 7
      %p166 = por %p164, %p165
      %p167 = scmp.ne.s32.totalorder %s156, %s157
      %p168 = scmp.eq.s32.totalorder %s22, 0
      %p169 = por %p167, %p168
      %p170 = scmp.ne.s32.totalorder %s156, %s157
      %p171 = scmp.eq.s32.totalorder %s23, 7
      %p172 = por %p170, %p171
      %p174 = scmp.ne.s32.totalorder %s157, %s173
      %p175 = scmp.eq.s32.totalorder %s23, 0
      %p176 = por %p174, %p175
      %p177 = scmp.le.s32.totalorder 1, %s17
      %p178 = scmp.lt.s32.totalorder %s17, 9
      %p179 = pnand %p177, %p178
      %p180 = pneg %p179
      // Predicated region
      $region9: #{tpu_custom_call.1} parent=5 // pred_check
        _
      $region10: #{tpu_custom_call.1} parent=5 // pred_check_branch
        %182 = sbr.rel (%p179) target = $region12
      $region11: #{tpu_custom_call.1} parent=5 // pred_region
        %s183 = ssub.s32 %s17, 1
        // Predicated region
        $region13: #{tpu_custom_call.1} parent=11 // pred_check
          %p184 = pneg %p78
        $region14: #{tpu_custom_call.1} parent=11 // pred_check_branch
          %186 = sbr.rel (%p184) target = $region16
        $region15: #{tpu_custom_call.1} parent=11 // pred_region
          _
        $region16: #{tpu_custom_call.1} parent=11 // pred_fallthru
          _
        // Predicated region
        $region17: #{tpu_custom_call.1} parent=11 // pred_check
          %p187 = pneg %p99
        $region18: #{tpu_custom_call.1} parent=11 // pred_check_branch
          %189 = sbr.rel (%p187) target = $region20
        $region19: #{tpu_custom_call.1} parent=11 // pred_region
          _
        $region20: #{tpu_custom_call.1} parent=11 // pred_fallthru
          _
        // Predicated region
        $region21: #{tpu_custom_call.1} parent=11 // pred_check
          %p190 = pneg %p120
        $region22: #{tpu_custom_call.1} parent=11 // pred_check_branch
          %192 = sbr.rel (%p190) target = $region24
        $region23: #{tpu_custom_call.1} parent=11 // pred_region
          _
        $region24: #{tpu_custom_call.1} parent=11 // pred_fallthru
          _
        // Predicated region
        $region25: #{tpu_custom_call.1} parent=11 // pred_check
          %p193 = pneg %p141
        $region26: #{tpu_custom_call.1} parent=11 // pred_check_branch
          %195 = sbr.rel (%p193) target = $region28
        $region27: #{tpu_custom_call.1} parent=11 // pred_region
          _
        $region28: #{tpu_custom_call.1} parent=11 // pred_fallthru
          _
      $region12: #{tpu_custom_call.1} parent=5 // pred_fallthru
        _
      %p196 = scmp.lt.s32.totalorder %s17, 8
      // Predicated region
      $region29: #{tpu_custom_call.1} parent=5 // pred_check
        %p197 = pneg %p196
      $region30: #{tpu_custom_call.1} parent=5 // pred_check_branch
        %199 = sbr.rel (%p197) target = $region32
      $region31: #{tpu_custom_call.1} parent=5 // pred_region
        // Predicated region
        $region33: #{tpu_custom_call.1} parent=31 // pred_check
          %p200 = pneg %p51
        $region34: #{tpu_custom_call.1} parent=31 // pred_check_branch
          %202 = sbr.rel (%p200) target = $region36
        $region35: #{tpu_custom_call.1} parent=31 // pred_region
          %s203 = sand.u32 %s41, 1
          %s204 = scalar_lea.sflag [#allocation3], %s203
          %s205 = sand.u32 %s41, 1
          %s206 = smul.addr %s205, 16
          %s207 = scalar_lea.vmem [#allocation2], %s206
          %s208 = smul.u32 2, %s25
          %210 = vsyncadd %s204, 0
          %s211 = smul.addr %s24, 8
          %s212 = sadd.s32 %s208, %s211
          %s213 = smul.addr %s212, 8
          %s214 = scalar_lea.hbm %s0, %s213
          %s216 = sshll.u32 %s214, 4
          %s217 = int_to_ptr.hbm [resolvable:$true] %s216
          %s218 = sshll.u32 %s207, 4
          %s219 = int_to_ptr.vmem [resolvable:$true] %s218
          %221 = dma.hbm_to_vmem [thread:$0]  %s217, 256, %s219, %s204
        $region36: #{tpu_custom_call.1} parent=31 // pred_fallthru
          _
      $region32: #{tpu_custom_call.1} parent=5 // pred_fallthru
        _
      %p222 = scmp.le.s32.totalorder 1, %s17
      %p223 = scmp.lt.s32.totalorder %s17, 9
      %p224 = pnand %p222, %p223
      %p225 = pneg %p224
      // Predicated region
      $region37: #{tpu_custom_call.1} parent=5 // pred_check
        _
      $region38: #{tpu_custom_call.1} parent=5 // pred_check_branch
        %227 = sbr.rel (%p224) target = $region40
      $region39: #{tpu_custom_call.1} parent=5 // pred_region
        %s228 = ssub.s32 %s17, 1
        %s229 = sand.u32 %s44, 1
        %s230 = scalar_lea.sflag [#allocation3], %s229
        %s231 = sand.u32 %s44, 1
        %s232 = smul.addr %s231, 16
        %s233 = scalar_lea.vmem [#allocation2], %s232
        // Predicated region
        $region41: #{tpu_custom_call.1} parent=39 // pred_check
          %p234 = pneg %p57
        $region42: #{tpu_custom_call.1} parent=39 // pred_check_branch
          %236 = sbr.rel (%p234) target = $region44
        $region43: #{tpu_custom_call.1} parent=39 // pred_region
          %238 = dma.done %s230, 256
        $region44: #{tpu_custom_call.1} parent=39 // pred_fallthru
          _
        %s239 = sand.u32 %s44, 1
        %s240 = scalar_lea.sflag [#allocation3], %s239
        %s241 = sand.u32 %s44, 1
        %s242 = smul.addr %s241, 16
        %s243 = scalar_lea.vmem [#allocation2], %s242
        %p244 = pneg %p57
        %p245 = pneg %p54
        %p246 = pneg %p78
        %p247 = pneg %p75
        %p248 = pneg %p99
        %p249 = pneg %p96
        %p250 = pneg %p120
        %p251 = pneg %p117
        %p252 = pneg %p141
        %p253 = pneg %p138
        %p254 = pneg %p169
        %p255 = pneg %p166
        %s256 = sand.u32 %s156, 1
        %s257 = scalar_lea.sflag [#allocation4], %s256
        %s258 = sand.u32 %s156, 1
        %s259 = smul.addr %s258, 16
        %s260 = scalar_lea.vmem [#allocation5], %s259
        %s261 = smul.u32 2, %s27
        %v262 = vld [vmem:[%s233] sm:$0xff]
        %v263 = vld [vmem:[%s233 + $0x8] sm:$0xff]
        %v264 = vld [vmem:[%s1] sm:$0xff]
        %266 = vset.pattern.permute.xlu0 0
        %267 = vperm.xlu0 %266, %v264
        %v268 = vpop.permute.xlu0 %267
        %v270 = vmul.f32 %v262, %v268
        %v271 = vmul.f32 %v263, %v268
        %v272 = vld [vmem:[%s2] sm:$0xff]
        %274 = vset.pattern.permute.xlu0 0
        %275 = vperm.xlu0 %274, %v272
        %v276 = vpop.permute.xlu0 %275
        %v278 = vadd.f32 %v270, %v276
        %v279 = vadd.f32 %v271, %v276
        %v280 = vmul.f32 %v278, 0.5
        %v281 = vmul.f32 %v279, 0.5
        %v282 = vmul.f32 %v278, 0.70710677
        %v283 = vmul.f32 %v279, 0.70710677
        %v284 = vmul.f32 %v282, %v282
        %v285 = vmin.f32 16.0, %v284
        %v286 = vmul.f32 %v285, 2.1237322e-06
        %v287 = vadd.f32 %v286, 0.00028619796
        %v288 = vmul.f32 %v285, %v287
        %v289 = vadd.f32 %v288, 0.0036580483
        %v290 = vmul.f32 %v285, %v289
        %v291 = vadd.f32 %v290, 0.05243302
        %v292 = vmul.f32 %v285, %v291
        %v293 = vadd.f32 %v292, 0.18741608
        %v294 = vmul.f32 %v285, %v293
        %v295 = vadd.f32 %v294, 1.1283791
        %v296 = vmul.f32 %v282, %v295
        %v297 = vmul.f32 %v285, 3.8918573e-05
        %v298 = vadd.f32 %v297, 0.001143296
        %v299 = vmul.f32 %v285, %v298
        %v300 = vadd.f32 %v299, 0.014752088
        %v301 = vmul.f32 %v285, %v300
        %v302 = vadd.f32 %v301, 0.112945676
        %v303 = vmul.f32 %v285, %v302
        %v304 = vadd.f32 %v303, 0.4994258
        %v305 = vmul.f32 %v285, %v304
        %v306 = vadd.f32 %v305, 1.0
        %v307 = vrcp.pop %v306
        %v308 = vmul.f32 %v306, %v307
        %v309 = vsub.f32 1.0, %v308
        %v310 = vmul.f32 %v307, %v309
        %v311 = vadd.f32 %v307, %v310
        %vm312 = vweird.f32 %v306
        %vm313 = vweird.f32 %v307
        %vm314 = vmor %vm312, %vm313
        %v315 = vsel %vm314, %v307, %v311
        %v316 = vand.u32 2147483647, %v306
        %vm317 = vcmp.eq.f32.partialorder %v316, 8.507059e+37
        %v318 = vand.u32 %v306, 2147483648
        %v319 = vor.u32 1.1754944e-38, %v318
        %v320 = vsel %vm317, %v319, %v315
        %v321 = vmul.f32 %v296, %v320
        %v322 = vmin.f32 %v321, 1.0
        %v323 = vmax.f32 %v322, -1.0
        %v324 = vmul.f32 %v283, %v283
        %v325 = vmin.f32 16.0, %v324
        %v326 = vmul.f32 %v325, 2.1237322e-06
        %v327 = vadd.f32 %v326, 0.00028619796
        %v328 = vmul.f32 %v325, %v327
        %v329 = vadd.f32 %v328, 0.0036580483
        %v330 = vmul.f32 %v325, %v329
        %v331 = vadd.f32 %v330, 0.05243302
        %v332 = vmul.f32 %v325, %v331
        %v333 = vadd.f32 %v332, 0.18741608
        %v334 = vmul.f32 %v325, %v333
        %v335 = vadd.f32 %v334, 1.1283791
        %v336 = vmul.f32 %v283, %v335
        %v337 = vmul.f32 %v325, 3.8918573e-05
        %v338 = vadd.f32 %v337, 0.001143296
        %v339 = vmul.f32 %v325, %v338
        %v340 = vadd.f32 %v339, 0.014752088
        %v341 = vmul.f32 %v325, %v340
        %v342 = vadd.f32 %v341, 0.112945676
        %v343 = vmul.f32 %v325, %v342
        %v344 = vadd.f32 %v343, 0.4994258
        %v345 = vmul.f32 %v325, %v344
        %v346 = vadd.f32 %v345, 1.0
        %v347 = vrcp.pop %v346
        %v348 = vmul.f32 %v346, %v347
        %v349 = vsub.f32 1.0, %v348
        %v350 = vmul.f32 %v347, %v349
        %v351 = vadd.f32 %v347, %v350
        %vm352 = vweird.f32 %v346
        %vm353 = vweird.f32 %v347
        %vm354 = vmor %vm352, %vm353
        %v355 = vsel %vm354, %v347, %v351
        %v356 = vand.u32 2147483647, %v346
        %vm357 = vcmp.eq.f32.partialorder %v356, 8.507059e+37
        %v358 = vand.u32 %v346, 2147483648
        %v359 = vor.u32 1.1754944e-38, %v358
        %v360 = vsel %vm357, %v359, %v355
        %v361 = vmul.f32 %v336, %v360
        %v362 = vmin.f32 %v361, 1.0
        %v363 = vmax.f32 %v362, -1.0
        %v364 = vadd.f32 %v323, 1.0
        %v365 = vadd.f32 %v363, 1.0
        %v366 = vmul.f32 %v280, %v364
        %v367 = vmul.f32 %v281, %v365
        %v368 = vld [vmem:[%s3] sm:$0xff]
        %369 = vxpose.xlu0.b32.start [1/16] %v366, 128
        %370 = vxpose.xlu0.b32.cont [2/16] 0.0, 128
        %371 = vxpose.xlu0.b32.cont [3/16] 0.0, 128
        %372 = vxpose.xlu0.b32.cont [4/16] 0.0, 128
        %373 = vxpose.xlu0.b32.cont [5/16] 0.0, 128
        %374 = vxpose.xlu0.b32.cont [6/16] 0.0, 128
        %375 = vxpose.xlu0.b32.cont [7/16] 0.0, 128
        %376 = vxpose.xlu0.b32.cont [8/16] 0.0, 128
        %377 = vxpose.xlu0.b32.cont [9/16] 0.0, 128
        %378 = vxpose.xlu0.b32.cont [10/16] 0.0, 128
        %379 = vxpose.xlu0.b32.cont [11/16] 0.0, 128
        %380 = vxpose.xlu0.b32.cont [12/16] 0.0, 128
        %381 = vxpose.xlu0.b32.cont [13/16] 0.0, 128
        %382 = vxpose.xlu0.b32.cont [14/16] 0.0, 128
        %383 = vxpose.xlu0.b32.cont [15/16] 0.0, 128
        %384 = vxpose.xlu0.b32.end [16/16] 0.0, 128
        %v385 = vpop.trf.xlu0
        %v386 = vpop.trf.xlu0
        %v387 = vpop.trf.xlu0
        %v388 = vpop.trf.xlu0
        %v389 = vpop.trf.xlu0
        %v390 = vpop.trf.xlu0
        %v391 = vpop.trf.xlu0
        %v392 = vpop.trf.xlu0
        %v393 = vpop.trf.xlu0
        %v394 = vpop.trf.xlu0
        %v395 = vpop.trf.xlu0
        %v396 = vpop.trf.xlu0
        %v397 = vpop.trf.xlu0
        %v398 = vpop.trf.xlu0
        %v399 = vpop.trf.xlu0
        %v400 = vpop.trf.xlu0
        %401 = vxpose.xlu0.b32.start [1/16] %v367, 128
        %402 = vxpose.xlu0.b32.cont [2/16] 0.0, 128
        %403 = vxpose.xlu0.b32.cont [3/16] 0.0, 128
        %404 = vxpose.xlu0.b32.cont [4/16] 0.0, 128
        %405 = vxpose.xlu0.b32.cont [5/16] 0.0, 128
        %406 = vxpose.xlu0.b32.cont [6/16] 0.0, 128
        %407 = vxpose.xlu0.b32.cont [7/16] 0.0, 128
        %408 = vxpose.xlu0.b32.cont [8/16] 0.0, 128
        %409 = vxpose.xlu0.b32.cont [9/16] 0.0, 128
        %410 = vxpose.xlu0.b32.cont [10/16] 0.0, 128
        %411 = vxpose.xlu0.b32.cont [11/16] 0.0, 128
        %412 = vxpose.xlu0.b32.cont [12/16] 0.0, 128
        %413 = vxpose.xlu0.b32.cont [13/16] 0.0, 128
        %414 = vxpose.xlu0.b32.cont [14/16] 0.0, 128
        %415 = vxpose.xlu0.b32.cont [15/16] 0.0, 128
        %416 = vxpose.xlu0.b32.end [16/16] 0.0, 128
        %v417 = vpop.trf.xlu0
        %v418 = vpop.trf.xlu0
        %v419 = vpop.trf.xlu0
        %v420 = vpop.trf.xlu0
        %v421 = vpop.trf.xlu0
        %v422 = vpop.trf.xlu0
        %v423 = vpop.trf.xlu0
        %v424 = vpop.trf.xlu0
        %v425 = vpop.trf.xlu0
        %v426 = vpop.trf.xlu0
        %v427 = vpop.trf.xlu0
        %v428 = vpop.trf.xlu0
        %v429 = vpop.trf.xlu0
        %v430 = vpop.trf.xlu0
        %v431 = vpop.trf.xlu0
        %v432 = vpop.trf.xlu0
        %vm433 = vcmask 64512
        %v435 = vsel %vm433, %v385, 0
        %v438 = vsel %vm433, %v386, 0
        %v441 = vsel %vm433, %v387, 0
        %v444 = vsel %vm433, %v388, 0
        %v447 = vsel %vm433, %v389, 0
        %v450 = vsel %vm433, %v390, 0
        %v453 = vsel %vm433, %v391, 0
        %v456 = vsel %vm433, %v392, 0
        %v459 = vsel %vm433, %v393, 0
        %v462 = vsel %vm433, %v394, 0
        %v465 = vsel %vm433, %v395, 0
        %v468 = vsel %vm433, %v396, 0
        %v471 = vsel %vm433, %v397, 0
        %v474 = vsel %vm433, %v398, 0
        %v477 = vsel %vm433, %v399, 0
        %v480 = vsel %vm433, %v400, 0
        %v483 = vsel %vm433, %v417, 0
        %v486 = vsel %vm433, %v418, 0
        %v489 = vsel %vm433, %v419, 0
        %v492 = vsel %vm433, %v420, 0
        %v495 = vsel %vm433, %v421, 0
        %v498 = vsel %vm433, %v422, 0
        %v501 = vsel %vm433, %v423, 0
        %v504 = vsel %vm433, %v424, 0
        %v507 = vsel %vm433, %v425, 0
        %v510 = vsel %vm433, %v426, 0
        %v513 = vsel %vm433, %v427, 0
        %v516 = vsel %vm433, %v428, 0
        %v519 = vsel %vm433, %v429, 0
        %v522 = vsel %vm433, %v430, 0
        %v525 = vsel %vm433, %v431, 0
        %v528 = vsel %vm433, %v432, 0
        %530 = vmatpush.msra.mxu0 0.0
        %531 = vmatpush.msra.mxu0 0.0
        %532 = vmatpush.msra.mxu0 0.0
        %533 = vmatpush.msra.mxu0 0.0
        %534 = vmatpush.msra.mxu0 0.0
        %535 = vmatpush.msra.mxu0 0.0
        %536 = vmatpush.msra.mxu0 0.0
        %537 = vmatpush.msra.mxu0 0.0
        %538 = vmatpush.msra.mxu0 0.0
        %539 = vmatpush.msra.mxu0 0.0
        %540 = vmatpush.msra.mxu0 0.0
        %541 = vmatpush.msra.mxu0 0.0
        %542 = vmatpush.msra.mxu0 0.0
        %543 = vmatpush.msra.mxu0 0.0
        %544 = vmatpush.msra.mxu0 0.0
        %545 = vmatpush.msra.mxu0 %v368
        %546 = vmatmul.f32.gmra.mxu0 %v435
        %v547 = vpop.f32.mrf.mxu0
        %v548 = vadd.f32 0.0, %v547
        %549 = vmatmul.f32.gmra.mxu0 %v438
        %v550 = vpop.f32.mrf.mxu0
        %v551 = vadd.f32 0.0, %v550
        %552 = vmatmul.f32.gmra.mxu0 %v441
        %v553 = vpop.f32.mrf.mxu0
        %v554 = vadd.f32 0.0, %v553
        %555 = vmatmul.f32.gmra.mxu0 %v444
        %v556 = vpop.f32.mrf.mxu0
        %v557 = vadd.f32 0.0, %v556
        %558 = vmatmul.f32.gmra.mxu0 %v447
        %v559 = vpop.f32.mrf.mxu0
        %v560 = vadd.f32 0.0, %v559
        %561 = vmatmul.f32.gmra.mxu0 %v450
        %v562 = vpop.f32.mrf.mxu0
        %v563 = vadd.f32 0.0, %v562
        %564 = vmatmul.f32.gmra.mxu0 %v453
        %v565 = vpop.f32.mrf.mxu0
        %v566 = vadd.f32 0.0, %v565
        %567 = vmatmul.f32.gmra.mxu0 %v456
        %v568 = vpop.f32.mrf.mxu0
        %v569 = vadd.f32 0.0, %v568
        %570 = vmatmul.f32.gmra.mxu0 %v459
        %v571 = vpop.f32.mrf.mxu0
        %v572 = vadd.f32 0.0, %v571
        %573 = vmatmul.f32.gmra.mxu0 %v462
        %v574 = vpop.f32.mrf.mxu0
        %v575 = vadd.f32 0.0, %v574
        %576 = vmatmul.f32.gmra.mxu0 %v465
        %v577 = vpop.f32.mrf.mxu0
        %v578 = vadd.f32 0.0, %v577
        %579 = vmatmul.f32.gmra.mxu0 %v468
        %v580 = vpop.f32.mrf.mxu0
        %v581 = vadd.f32 0.0, %v580
        %582 = vmatmul.f32.gmra.mxu0 %v471
        %v583 = vpop.f32.mrf.mxu0
        %v584 = vadd.f32 0.0, %v583
        %585 = vmatmul.f32.gmra.mxu0 %v474
        %v586 = vpop.f32.mrf.mxu0
        %v587 = vadd.f32 0.0, %v586
        %588 = vmatmul.f32.gmra.mxu0 %v477
        %v589 = vpop.f32.mrf.mxu0
        %v590 = vadd.f32 0.0, %v589
        %591 = vmatmul.f32.gmra.mxu0 %v480
        %v592 = vpop.f32.mrf.mxu0
        %v593 = vadd.f32 0.0, %v592
        %594 = vmatmul.f32.gmra.mxu0 %v483
        %v595 = vpop.f32.mrf.mxu0
        %v596 = vadd.f32 0.0, %v595
        %597 = vmatmul.f32.gmra.mxu0 %v486
        %v598 = vpop.f32.mrf.mxu0
        %v599 = vadd.f32 0.0, %v598
        %600 = vmatmul.f32.gmra.mxu0 %v489
        %v601 = vpop.f32.mrf.mxu0
        %v602 = vadd.f32 0.0, %v601
        %603 = vmatmul.f32.gmra.mxu0 %v492
        %v604 = vpop.f32.mrf.mxu0
        %v605 = vadd.f32 0.0, %v604
        %606 = vmatmul.f32.gmra.mxu0 %v495
        %v607 = vpop.f32.mrf.mxu0
        %v608 = vadd.f32 0.0, %v607
        %609 = vmatmul.f32.gmra.mxu0 %v498
        %v610 = vpop.f32.mrf.mxu0
        %v611 = vadd.f32 0.0, %v610
        %612 = vmatmul.f32.gmra.mxu0 %v501
        %v613 = vpop.f32.mrf.mxu0
        %v614 = vadd.f32 0.0, %v613
        %615 = vmatmul.f32.gmra.mxu0 %v504
        %v616 = vpop.f32.mrf.mxu0
        %v617 = vadd.f32 0.0, %v616
        %618 = vmatmul.f32.gmra.mxu0 %v507
        %v619 = vpop.f32.mrf.mxu0
        %v620 = vadd.f32 0.0, %v619
        %621 = vmatmul.f32.gmra.mxu0 %v510
        %v622 = vpop.f32.mrf.mxu0
        %v623 = vadd.f32 0.0, %v622
        %624 = vmatmul.f32.gmra.mxu0 %v513
        %v625 = vpop.f32.mrf.mxu0
        %v626 = vadd.f32 0.0, %v625
        %627 = vmatmul.f32.gmra.mxu0 %v516
        %v628 = vpop.f32.mrf.mxu0
        %v629 = vadd.f32 0.0, %v628
        %630 = vmatmul.f32.gmra.mxu0 %v519
        %v631 = vpop.f32.mrf.mxu0
        %v632 = vadd.f32 0.0, %v631
        %633 = vmatmul.f32.gmra.mxu0 %v522
        %v634 = vpop.f32.mrf.mxu0
        %v635 = vadd.f32 0.0, %v634
        %636 = vmatmul.f32.gmra.mxu0 %v525
        %v637 = vpop.f32.mrf.mxu0
        %v638 = vadd.f32 0.0, %v637
        %639 = vmatmul.f32.gmra.mxu0 %v528
        %v640 = vpop.f32.mrf.mxu0
        %v641 = vadd.f32 0.0, %v640
        %642 = vdwg.mxu0
        %v675 = vrot.slane %v548, 2
        %v676 = vrot.slane %v548, 4
        %v677 = vrot.slane %v548, 6
        %v678 = vrot.slane %v551, 2
        %v679 = vrot.slane %v551, 4
        %v680 = vrot.slane %v551, 6
        %v681 = vrot.slane %v554, 2
        %v682 = vrot.slane %v554, 4
        %v683 = vrot.slane %v554, 6
        %v684 = vrot.slane %v557, 2
        %v685 = vrot.slane %v557, 4
        %v686 = vrot.slane %v557, 6
        %v687 = vrot.slane %v560, 2
        %v688 = vrot.slane %v560, 4
        %v689 = vrot.slane %v560, 6
        %v690 = vrot.slane %v563, 2
        %v691 = vrot.slane %v563, 4
        %v692 = vrot.slane %v563, 6
        %v693 = vrot.slane %v566, 2
        %v694 = vrot.slane %v566, 4
        %v695 = vrot.slane %v566, 6
        %v696 = vrot.slane %v569, 2
        %v697 = vrot.slane %v569, 4
        %v698 = vrot.slane %v569, 6
        %v699 = vrot.slane %v572, 2
        %v700 = vrot.slane %v572, 4
        %v701 = vrot.slane %v572, 6
        %v702 = vrot.slane %v575, 2
        %v703 = vrot.slane %v575, 4
        %v704 = vrot.slane %v575, 6
        %v705 = vrot.slane %v578, 2
        %v706 = vrot.slane %v578, 4
        %v707 = vrot.slane %v578, 6
        %v708 = vrot.slane %v581, 2
        %v709 = vrot.slane %v581, 4
        %v710 = vrot.slane %v581, 6
        %v711 = vrot.slane %v584, 2
        %v712 = vrot.slane %v584, 4
        %v713 = vrot.slane %v584, 6
        %v714 = vrot.slane %v587, 2
        %v715 = vrot.slane %v587, 4
        %v716 = vrot.slane %v587, 6
        %v717 = vrot.slane %v590, 2
        %v718 = vrot.slane %v590, 4
        %v719 = vrot.slane %v590, 6
        %v720 = vrot.slane %v593, 2
        %v721 = vrot.slane %v593, 4
        %v722 = vrot.slane %v593, 6
        %v723 = vrot.slane %v596, 2
        %v724 = vrot.slane %v596, 4
        %v725 = vrot.slane %v596, 6
        %v726 = vrot.slane %v599, 2
        %v727 = vrot.slane %v599, 4
        %v728 = vrot.slane %v599, 6
        %v729 = vrot.slane %v602, 2
        %v730 = vrot.slane %v602, 4
        %v731 = vrot.slane %v602, 6
        %v732 = vrot.slane %v605, 2
        %v733 = vrot.slane %v605, 4
        %v734 = vrot.slane %v605, 6
        %v735 = vrot.slane %v608, 2
        %v736 = vrot.slane %v608, 4
        %v737 = vrot.slane %v608, 6
        %v738 = vrot.slane %v611, 2
        %v739 = vrot.slane %v611, 4
        %v740 = vrot.slane %v611, 6
        %v741 = vrot.slane %v614, 2
        %v742 = vrot.slane %v614, 4
        %v743 = vrot.slane %v614, 6
        %v744 = vrot.slane %v617, 2
        %v745 = vrot.slane %v617, 4
        %v746 = vrot.slane %v617, 6
        %v747 = vrot.slane %v620, 2
        %v748 = vrot.slane %v620, 4
        %v749 = vrot.slane %v620, 6
        %v750 = vrot.slane %v623, 2
        %v751 = vrot.slane %v623, 4
        %v752 = vrot.slane %v623, 6
        %v753 = vrot.slane %v626, 2
        %v754 = vrot.slane %v626, 4
        %v755 = vrot.slane %v626, 6
        %v756 = vrot.slane %v629, 2
        %v757 = vrot.slane %v629, 4
        %v758 = vrot.slane %v629, 6
        %v759 = vrot.slane %v632, 2
        %v760 = vrot.slane %v632, 4
        %v761 = vrot.slane %v632, 6
        %v762 = vrot.slane %v635, 2
        %v763 = vrot.slane %v635, 4
        %v764 = vrot.slane %v635, 6
        %v765 = vrot.slane %v638, 2
        %v766 = vrot.slane %v638, 4
        %v767 = vrot.slane %v638, 6
        %v768 = vrot.slane %v641, 2
        %v769 = vrot.slane %v641, 4
        %v770 = vrot.slane %v641, 6
        %vm867 = vcmask 123904
        %v868 = vsel %vm867, %v548, -inf
        %v869 = vrot.slane %v868, 4
        %v870 = vmax.f32 %v868, %v869
        %v871 = vrot.slane %v870, 2
        %v872 = vmax.f32 %v870, %v871
        %v873 = vrot.slane %v872, 1
        %v874 = vmax.f32 %v872, %v873
        %v875 = vsel %vm867, %v675, -inf
        %v876 = vrot.slane %v875, 4
        %v877 = vmax.f32 %v875, %v876
        %v878 = vrot.slane %v877, 2
        %v879 = vmax.f32 %v877, %v878
        %v880 = vrot.slane %v879, 1
        %v881 = vmax.f32 %v879, %v880
        %v882 = vsel %vm867, %v676, -inf
        %v883 = vrot.slane %v882, 4
        %v884 = vmax.f32 %v882, %v883
        %v885 = vrot.slane %v884, 2
        %v886 = vmax.f32 %v884, %v885
        %v887 = vrot.slane %v886, 1
        %v888 = vmax.f32 %v886, %v887
        %v889 = vsel %vm867, %v677, -inf
        %v890 = vrot.slane %v889, 4
        %v891 = vmax.f32 %v889, %v890
        %v892 = vrot.slane %v891, 2
        %v893 = vmax.f32 %v891, %v892
        %v894 = vrot.slane %v893, 1
        %v895 = vmax.f32 %v893, %v894
        %v896 = vsel %vm867, %v551, -inf
        %v897 = vrot.slane %v896, 4
        %v898 = vmax.f32 %v896, %v897
        %v899 = vrot.slane %v898, 2
        %v900 = vmax.f32 %v898, %v899
        %v901 = vrot.slane %v900, 1
        %v902 = vmax.f32 %v900, %v901
        %v903 = vsel %vm867, %v678, -inf
        %v904 = vrot.slane %v903, 4
        %v905 = vmax.f32 %v903, %v904
        %v906 = vrot.slane %v905, 2
        %v907 = vmax.f32 %v905, %v906
        %v908 = vrot.slane %v907, 1
        %v909 = vmax.f32 %v907, %v908
        %v910 = vsel %vm867, %v679, -inf
        %v911 = vrot.slane %v910, 4
        %v912 = vmax.f32 %v910, %v911
        %v913 = vrot.slane %v912, 2
        %v914 = vmax.f32 %v912, %v913
        %v915 = vrot.slane %v914, 1
        %v916 = vmax.f32 %v914, %v915
        %v917 = vsel %vm867, %v680, -inf
        %v918 = vrot.slane %v917, 4
        %v919 = vmax.f32 %v917, %v918
        %v920 = vrot.slane %v919, 2
        %v921 = vmax.f32 %v919, %v920
        %v922 = vrot.slane %v921, 1
        %v923 = vmax.f32 %v921, %v922
        %v924 = vsel %vm867, %v554, -inf
        %v925 = vrot.slane %v924, 4
        %v926 = vmax.f32 %v924, %v925
        %v927 = vrot.slane %v926, 2
        %v928 = vmax.f32 %v926, %v927
        %v929 = vrot.slane %v928, 1
        %v930 = vmax.f32 %v928, %v929
        %v931 = vsel %vm867, %v681, -inf
        %v932 = vrot.slane %v931, 4
        %v933 = vmax.f32 %v931, %v932
        %v934 = vrot.slane %v933, 2
        %v935 = vmax.f32 %v933, %v934
        %v936 = vrot.slane %v935, 1
        %v937 = vmax.f32 %v935, %v936
        %v938 = vsel %vm867, %v682, -inf
        %v939 = vrot.slane %v938, 4
        %v940 = vmax.f32 %v938, %v939
        %v941 = vrot.slane %v940, 2
        %v942 = vmax.f32 %v940, %v941
        %v943 = vrot.slane %v942, 1
        %v944 = vmax.f32 %v942, %v943
        %v945 = vsel %vm867, %v683, -inf
        %v946 = vrot.slane %v945, 4
        %v947 = vmax.f32 %v945, %v946
        %v948 = vrot.slane %v947, 2
        %v949 = vmax.f32 %v947, %v948
        %v950 = vrot.slane %v949, 1
        %v951 = vmax.f32 %v949, %v950
        %v952 = vsel %vm867, %v557, -inf
        %v953 = vrot.slane %v952, 4
        %v954 = vmax.f32 %v952, %v953
        %v955 = vrot.slane %v954, 2
        %v956 = vmax.f32 %v954, %v955
        %v957 = vrot.slane %v956, 1
        %v958 = vmax.f32 %v956, %v957
        %v959 = vsel %vm867, %v684, -inf
        %v960 = vrot.slane %v959, 4
        %v961 = vmax.f32 %v959, %v960
        %v962 = vrot.slane %v961, 2
        %v963 = vmax.f32 %v961, %v962
        %v964 = vrot.slane %v963, 1
        %v965 = vmax.f32 %v963, %v964
        %v966 = vsel %vm867, %v685, -inf
        %v967 = vrot.slane %v966, 4
        %v968 = vmax.f32 %v966, %v967
        %v969 = vrot.slane %v968, 2
        %v970 = vmax.f32 %v968, %v969
        %v971 = vrot.slane %v970, 1
        %v972 = vmax.f32 %v970, %v971
        %v973 = vsel %vm867, %v686, -inf
        %v974 = vrot.slane %v973, 4
        %v975 = vmax.f32 %v973, %v974
        %v976 = vrot.slane %v975, 2
        %v977 = vmax.f32 %v975, %v976
        %v978 = vrot.slane %v977, 1
        %v979 = vmax.f32 %v977, %v978
        %v980 = vsel %vm867, %v560, -inf
        %v981 = vrot.slane %v980, 4
        %v982 = vmax.f32 %v980, %v981
        %v983 = vrot.slane %v982, 2
        %v984 = vmax.f32 %v982, %v983
        %v985 = vrot.slane %v984, 1
        %v986 = vmax.f32 %v984, %v985
        %v987 = vsel %vm867, %v687, -inf
        %v988 = vrot.slane %v987, 4
        %v989 = vmax.f32 %v987, %v988
        %v990 = vrot.slane %v989, 2
        %v991 = vmax.f32 %v989, %v990
        %v992 = vrot.slane %v991, 1
        %v993 = vmax.f32 %v991, %v992
        %v994 = vsel %vm867, %v688, -inf
        %v995 = vrot.slane %v994, 4
        %v996 = vmax.f32 %v994, %v995
        %v997 = vrot.slane %v996, 2
        %v998 = vmax.f32 %v996, %v997
        %v999 = vrot.slane %v998, 1
        %v1000 = vmax.f32 %v998, %v999
        %v1001 = vsel %vm867, %v689, -inf
        %v1002 = vrot.slane %v1001, 4
        %v1003 = vmax.f32 %v1001, %v1002
        %v1004 = vrot.slane %v1003, 2
        %v1005 = vmax.f32 %v1003, %v1004
        %v1006 = vrot.slane %v1005, 1
        %v1007 = vmax.f32 %v1005, %v1006
        %v1008 = vsel %vm867, %v563, -inf
        %v1009 = vrot.slane %v1008, 4
        %v1010 = vmax.f32 %v1008, %v1009
        %v1011 = vrot.slane %v1010, 2
        %v1012 = vmax.f32 %v1010, %v1011
        %v1013 = vrot.slane %v1012, 1
        %v1014 = vmax.f32 %v1012, %v1013
        %v1015 = vsel %vm867, %v690, -inf
        %v1016 = vrot.slane %v1015, 4
        %v1017 = vmax.f32 %v1015, %v1016
        %v1018 = vrot.slane %v1017, 2
        %v1019 = vmax.f32 %v1017, %v1018
        %v1020 = vrot.slane %v1019, 1
        %v1021 = vmax.f32 %v1019, %v1020
        %v1022 = vsel %vm867, %v691, -inf
        %v1023 = vrot.slane %v1022, 4
        %v1024 = vmax.f32 %v1022, %v1023
        %v1025 = vrot.slane %v1024, 2
        %v1026 = vmax.f32 %v1024, %v1025
        %v1027 = vrot.slane %v1026, 1
        %v1028 = vmax.f32 %v1026, %v1027
        %v1029 = vsel %vm867, %v692, -inf
        %v1030 = vrot.slane %v1029, 4
        %v1031 = vmax.f32 %v1029, %v1030
        %v1032 = vrot.slane %v1031, 2
        %v1033 = vmax.f32 %v1031, %v1032
        %v1034 = vrot.slane %v1033, 1
        %v1035 = vmax.f32 %v1033, %v1034
        %v1036 = vsel %vm867, %v566, -inf
        %v1037 = vrot.slane %v1036, 4
        %v1038 = vmax.f32 %v1036, %v1037
        %v1039 = vrot.slane %v1038, 2
        %v1040 = vmax.f32 %v1038, %v1039
        %v1041 = vrot.slane %v1040, 1
        %v1042 = vmax.f32 %v1040, %v1041
        %v1043 = vsel %vm867, %v693, -inf
        %v1044 = vrot.slane %v1043, 4
        %v1045 = vmax.f32 %v1043, %v1044
        %v1046 = vrot.slane %v1045, 2
        %v1047 = vmax.f32 %v1045, %v1046
        %v1048 = vrot.slane %v1047, 1
        %v1049 = vmax.f32 %v1047, %v1048
        %v1050 = vsel %vm867, %v694, -inf
        %v1051 = vrot.slane %v1050, 4
        %v1052 = vmax.f32 %v1050, %v1051
        %v1053 = vrot.slane %v1052, 2
        %v1054 = vmax.f32 %v1052, %v1053
        %v1055 = vrot.slane %v1054, 1
        %v1056 = vmax.f32 %v1054, %v1055
        %v1057 = vsel %vm867, %v695, -inf
        %v1058 = vrot.slane %v1057, 4
        %v1059 = vmax.f32 %v1057, %v1058
        %v1060 = vrot.slane %v1059, 2
        %v1061 = vmax.f32 %v1059, %v1060
        %v1062 = vrot.slane %v1061, 1
        %v1063 = vmax.f32 %v1061, %v1062
        %v1064 = vsel %vm867, %v569, -inf
        %v1065 = vrot.slane %v1064, 4
        %v1066 = vmax.f32 %v1064, %v1065
        %v1067 = vrot.slane %v1066, 2
        %v1068 = vmax.f32 %v1066, %v1067
        %v1069 = vrot.slane %v1068, 1
        %v1070 = vmax.f32 %v1068, %v1069
        %v1071 = vsel %vm867, %v696, -inf
        %v1072 = vrot.slane %v1071, 4
        %v1073 = vmax.f32 %v1071, %v1072
        %v1074 = vrot.slane %v1073, 2
        %v1075 = vmax.f32 %v1073, %v1074
        %v1076 = vrot.slane %v1075, 1
        %v1077 = vmax.f32 %v1075, %v1076
        %v1078 = vsel %vm867, %v697, -inf
        %v1079 = vrot.slane %v1078, 4
        %v1080 = vmax.f32 %v1078, %v1079
        %v1081 = vrot.slane %v1080, 2
        %v1082 = vmax.f32 %v1080, %v1081
        %v1083 = vrot.slane %v1082, 1
        %v1084 = vmax.f32 %v1082, %v1083
        %v1085 = vsel %vm867, %v698, -inf
        %v1086 = vrot.slane %v1085, 4
        %v1087 = vmax.f32 %v1085, %v1086
        %v1088 = vrot.slane %v1087, 2
        %v1089 = vmax.f32 %v1087, %v1088
        %v1090 = vrot.slane %v1089, 1
        %v1091 = vmax.f32 %v1089, %v1090
        %v1092 = vsel %vm867, %v572, -inf
        %v1093 = vrot.slane %v1092, 4
        %v1094 = vmax.f32 %v1092, %v1093
        %v1095 = vrot.slane %v1094, 2
        %v1096 = vmax.f32 %v1094, %v1095
        %v1097 = vrot.slane %v1096, 1
        %v1098 = vmax.f32 %v1096, %v1097
        %v1099 = vsel %vm867, %v699, -inf
        %v1100 = vrot.slane %v1099, 4
        %v1101 = vmax.f32 %v1099, %v1100
        %v1102 = vrot.slane %v1101, 2
        %v1103 = vmax.f32 %v1101, %v1102
        %v1104 = vrot.slane %v1103, 1
        %v1105 = vmax.f32 %v1103, %v1104
        %v1106 = vsel %vm867, %v700, -inf
        %v1107 = vrot.slane %v1106, 4
        %v1108 = vmax.f32 %v1106, %v1107
        %v1109 = vrot.slane %v1108, 2
        %v1110 = vmax.f32 %v1108, %v1109
        %v1111 = vrot.slane %v1110, 1
        %v1112 = vmax.f32 %v1110, %v1111
        %v1113 = vsel %vm867, %v701, -inf
        %v1114 = vrot.slane %v1113, 4
        %v1115 = vmax.f32 %v1113, %v1114
        %v1116 = vrot.slane %v1115, 2
        %v1117 = vmax.f32 %v1115, %v1116
        %v1118 = vrot.slane %v1117, 1
        %v1119 = vmax.f32 %v1117, %v1118
        %v1120 = vsel %vm867, %v575, -inf
        %v1121 = vrot.slane %v1120, 4
        %v1122 = vmax.f32 %v1120, %v1121
        %v1123 = vrot.slane %v1122, 2
        %v1124 = vmax.f32 %v1122, %v1123
        %v1125 = vrot.slane %v1124, 1
        %v1126 = vmax.f32 %v1124, %v1125
        %v1127 = vsel %vm867, %v702, -inf
        %v1128 = vrot.slane %v1127, 4
        %v1129 = vmax.f32 %v1127, %v1128
        %v1130 = vrot.slane %v1129, 2
        %v1131 = vmax.f32 %v1129, %v1130
        %v1132 = vrot.slane %v1131, 1
        %v1133 = vmax.f32 %v1131, %v1132
        %v1134 = vsel %vm867, %v703, -inf
        %v1135 = vrot.slane %v1134, 4
        %v1136 = vmax.f32 %v1134, %v1135
        %v1137 = vrot.slane %v1136, 2
        %v1138 = vmax.f32 %v1136, %v1137
        %v1139 = vrot.slane %v1138, 1
        %v1140 = vmax.f32 %v1138, %v1139
        %v1141 = vsel %vm867, %v704, -inf
        %v1142 = vrot.slane %v1141, 4
        %v1143 = vmax.f32 %v1141, %v1142
        %v1144 = vrot.slane %v1143, 2
        %v1145 = vmax.f32 %v1143, %v1144
        %v1146 = vrot.slane %v1145, 1
        %v1147 = vmax.f32 %v1145, %v1146
        %v1148 = vsel %vm867, %v578, -inf
        %v1149 = vrot.slane %v1148, 4
        %v1150 = vmax.f32 %v1148, %v1149
        %v1151 = vrot.slane %v1150, 2
        %v1152 = vmax.f32 %v1150, %v1151
        %v1153 = vrot.slane %v1152, 1
        %v1154 = vmax.f32 %v1152, %v1153
        %v1155 = vsel %vm867, %v705, -inf
        %v1156 = vrot.slane %v1155, 4
        %v1157 = vmax.f32 %v1155, %v1156
        %v1158 = vrot.slane %v1157, 2
        %v1159 = vmax.f32 %v1157, %v1158
        %v1160 = vrot.slane %v1159, 1
        %v1161 = vmax.f32 %v1159, %v1160
        %v1162 = vsel %vm867, %v706, -inf
        %v1163 = vrot.slane %v1162, 4
        %v1164 = vmax.f32 %v1162, %v1163
        %v1165 = vrot.slane %v1164, 2
        %v1166 = vmax.f32 %v1164, %v1165
        %v1167 = vrot.slane %v1166, 1
        %v1168 = vmax.f32 %v1166, %v1167
        %v1169 = vsel %vm867, %v707, -inf
        %v1170 = vrot.slane %v1169, 4
        %v1171 = vmax.f32 %v1169, %v1170
        %v1172 = vrot.slane %v1171, 2
        %v1173 = vmax.f32 %v1171, %v1172
        %v1174 = vrot.slane %v1173, 1
        %v1175 = vmax.f32 %v1173, %v1174
        %v1176 = vsel %vm867, %v581, -inf
        %v1177 = vrot.slane %v1176, 4
        %v1178 = vmax.f32 %v1176, %v1177
        %v1179 = vrot.slane %v1178, 2
        %v1180 = vmax.f32 %v1178, %v1179
        %v1181 = vrot.slane %v1180, 1
        %v1182 = vmax.f32 %v1180, %v1181
        %v1183 = vsel %vm867, %v708, -inf
        %v1184 = vrot.slane %v1183, 4
        %v1185 = vmax.f32 %v1183, %v1184
        %v1186 = vrot.slane %v1185, 2
        %v1187 = vmax.f32 %v1185, %v1186
        %v1188 = vrot.slane %v1187, 1
        %v1189 = vmax.f32 %v1187, %v1188
        %v1190 = vsel %vm867, %v709, -inf
        %v1191 = vrot.slane %v1190, 4
        %v1192 = vmax.f32 %v1190, %v1191
        %v1193 = vrot.slane %v1192, 2
        %v1194 = vmax.f32 %v1192, %v1193
        %v1195 = vrot.slane %v1194, 1
        %v1196 = vmax.f32 %v1194, %v1195
        %v1197 = vsel %vm867, %v710, -inf
        %v1198 = vrot.slane %v1197, 4
        %v1199 = vmax.f32 %v1197, %v1198
        %v1200 = vrot.slane %v1199, 2
        %v1201 = vmax.f32 %v1199, %v1200
        %v1202 = vrot.slane %v1201, 1
        %v1203 = vmax.f32 %v1201, %v1202
        %v1204 = vsel %vm867, %v584, -inf
        %v1205 = vrot.slane %v1204, 4
        %v1206 = vmax.f32 %v1204, %v1205
        %v1207 = vrot.slane %v1206, 2
        %v1208 = vmax.f32 %v1206, %v1207
        %v1209 = vrot.slane %v1208, 1
        %v1210 = vmax.f32 %v1208, %v1209
        %v1211 = vsel %vm867, %v711, -inf
        %v1212 = vrot.slane %v1211, 4
        %v1213 = vmax.f32 %v1211, %v1212
        %v1214 = vrot.slane %v1213, 2
        %v1215 = vmax.f32 %v1213, %v1214
        %v1216 = vrot.slane %v1215, 1
        %v1217 = vmax.f32 %v1215, %v1216
        %v1218 = vsel %vm867, %v712, -inf
        %v1219 = vrot.slane %v1218, 4
        %v1220 = vmax.f32 %v1218, %v1219
        %v1221 = vrot.slane %v1220, 2
        %v1222 = vmax.f32 %v1220, %v1221
        %v1223 = vrot.slane %v1222, 1
        %v1224 = vmax.f32 %v1222, %v1223
        %v1225 = vsel %vm867, %v713, -inf
        %v1226 = vrot.slane %v1225, 4
        %v1227 = vmax.f32 %v1225, %v1226
        %v1228 = vrot.slane %v1227, 2
        %v1229 = vmax.f32 %v1227, %v1228
        %v1230 = vrot.slane %v1229, 1
        %v1231 = vmax.f32 %v1229, %v1230
        %v1232 = vsel %vm867, %v587, -inf
        %v1233 = vrot.slane %v1232, 4
        %v1234 = vmax.f32 %v1232, %v1233
        %v1235 = vrot.slane %v1234, 2
        %v1236 = vmax.f32 %v1234, %v1235
        %v1237 = vrot.slane %v1236, 1
        %v1238 = vmax.f32 %v1236, %v1237
        %v1239 = vsel %vm867, %v714, -inf
        %v1240 = vrot.slane %v1239, 4
        %v1241 = vmax.f32 %v1239, %v1240
        %v1242 = vrot.slane %v1241, 2
        %v1243 = vmax.f32 %v1241, %v1242
        %v1244 = vrot.slane %v1243, 1
        %v1245 = vmax.f32 %v1243, %v1244
        %v1246 = vsel %vm867, %v715, -inf
        %v1247 = vrot.slane %v1246, 4
        %v1248 = vmax.f32 %v1246, %v1247
        %v1249 = vrot.slane %v1248, 2
        %v1250 = vmax.f32 %v1248, %v1249
        %v1251 = vrot.slane %v1250, 1
        %v1252 = vmax.f32 %v1250, %v1251
        %v1253 = vsel %vm867, %v716, -inf
        %v1254 = vrot.slane %v1253, 4
        %v1255 = vmax.f32 %v1253, %v1254
        %v1256 = vrot.slane %v1255, 2
        %v1257 = vmax.f32 %v1255, %v1256
        %v1258 = vrot.slane %v1257, 1
        %v1259 = vmax.f32 %v1257, %v1258
        %v1260 = vsel %vm867, %v590, -inf
        %v1261 = vrot.slane %v1260, 4
        %v1262 = vmax.f32 %v1260, %v1261
        %v1263 = vrot.slane %v1262, 2
        %v1264 = vmax.f32 %v1262, %v1263
        %v1265 = vrot.slane %v1264, 1
        %v1266 = vmax.f32 %v1264, %v1265
        %v1267 = vsel %vm867, %v717, -inf
        %v1268 = vrot.slane %v1267, 4
        %v1269 = vmax.f32 %v1267, %v1268
        %v1270 = vrot.slane %v1269, 2
        %v1271 = vmax.f32 %v1269, %v1270
        %v1272 = vrot.slane %v1271, 1
        %v1273 = vmax.f32 %v1271, %v1272
        %v1274 = vsel %vm867, %v718, -inf
        %v1275 = vrot.slane %v1274, 4
        %v1276 = vmax.f32 %v1274, %v1275
        %v1277 = vrot.slane %v1276, 2
        %v1278 = vmax.f32 %v1276, %v1277
        %v1279 = vrot.slane %v1278, 1
        %v1280 = vmax.f32 %v1278, %v1279
        %v1281 = vsel %vm867, %v719, -inf
        %v1282 = vrot.slane %v1281, 4
        %v1283 = vmax.f32 %v1281, %v1282
        %v1284 = vrot.slane %v1283, 2
        %v1285 = vmax.f32 %v1283, %v1284
        %v1286 = vrot.slane %v1285, 1
        %v1287 = vmax.f32 %v1285, %v1286
        %v1288 = vsel %vm867, %v593, -inf
        %v1289 = vrot.slane %v1288, 4
        %v1290 = vmax.f32 %v1288, %v1289
        %v1291 = vrot.slane %v1290, 2
        %v1292 = vmax.f32 %v1290, %v1291
        %v1293 = vrot.slane %v1292, 1
        %v1294 = vmax.f32 %v1292, %v1293
        %v1295 = vsel %vm867, %v720, -inf
        %v1296 = vrot.slane %v1295, 4
        %v1297 = vmax.f32 %v1295, %v1296
        %v1298 = vrot.slane %v1297, 2
        %v1299 = vmax.f32 %v1297, %v1298
        %v1300 = vrot.slane %v1299, 1
        %v1301 = vmax.f32 %v1299, %v1300
        %v1302 = vsel %vm867, %v721, -inf
        %v1303 = vrot.slane %v1302, 4
        %v1304 = vmax.f32 %v1302, %v1303
        %v1305 = vrot.slane %v1304, 2
        %v1306 = vmax.f32 %v1304, %v1305
        %v1307 = vrot.slane %v1306, 1
        %v1308 = vmax.f32 %v1306, %v1307
        %v1309 = vsel %vm867, %v722, -inf
        %v1310 = vrot.slane %v1309, 4
        %v1311 = vmax.f32 %v1309, %v1310
        %v1312 = vrot.slane %v1311, 2
        %v1313 = vmax.f32 %v1311, %v1312
        %v1314 = vrot.slane %v1313, 1
        %v1315 = vmax.f32 %v1313, %v1314
        %v1316 = vsel %vm867, %v596, -inf
        %v1317 = vrot.slane %v1316, 4
        %v1318 = vmax.f32 %v1316, %v1317
        %v1319 = vrot.slane %v1318, 2
        %v1320 = vmax.f32 %v1318, %v1319
        %v1321 = vrot.slane %v1320, 1
        %v1322 = vmax.f32 %v1320, %v1321
        %v1323 = vsel %vm867, %v723, -inf
        %v1324 = vrot.slane %v1323, 4
        %v1325 = vmax.f32 %v1323, %v1324
        %v1326 = vrot.slane %v1325, 2
        %v1327 = vmax.f32 %v1325, %v1326
        %v1328 = vrot.slane %v1327, 1
        %v1329 = vmax.f32 %v1327, %v1328
        %v1330 = vsel %vm867, %v724, -inf
        %v1331 = vrot.slane %v1330, 4
        %v1332 = vmax.f32 %v1330, %v1331
        %v1333 = vrot.slane %v1332, 2
        %v1334 = vmax.f32 %v1332, %v1333
        %v1335 = vrot.slane %v1334, 1
        %v1336 = vmax.f32 %v1334, %v1335
        %v1337 = vsel %vm867, %v725, -inf
        %v1338 = vrot.slane %v1337, 4
        %v1339 = vmax.f32 %v1337, %v1338
        %v1340 = vrot.slane %v1339, 2
        %v1341 = vmax.f32 %v1339, %v1340
        %v1342 = vrot.slane %v1341, 1
        %v1343 = vmax.f32 %v1341, %v1342
        %v1344 = vsel %vm867, %v599, -inf
        %v1345 = vrot.slane %v1344, 4
        %v1346 = vmax.f32 %v1344, %v1345
        %v1347 = vrot.slane %v1346, 2
        %v1348 = vmax.f32 %v1346, %v1347
        %v1349 = vrot.slane %v1348, 1
        %v1350 = vmax.f32 %v1348, %v1349
        %v1351 = vsel %vm867, %v726, -inf
        %v1352 = vrot.slane %v1351, 4
        %v1353 = vmax.f32 %v1351, %v1352
        %v1354 = vrot.slane %v1353, 2
        %v1355 = vmax.f32 %v1353, %v1354
        %v1356 = vrot.slane %v1355, 1
        %v1357 = vmax.f32 %v1355, %v1356
        %v1358 = vsel %vm867, %v727, -inf
        %v1359 = vrot.slane %v1358, 4
        %v1360 = vmax.f32 %v1358, %v1359
        %v1361 = vrot.slane %v1360, 2
        %v1362 = vmax.f32 %v1360, %v1361
        %v1363 = vrot.slane %v1362, 1
        %v1364 = vmax.f32 %v1362, %v1363
        %v1365 = vsel %vm867, %v728, -inf
        %v1366 = vrot.slane %v1365, 4
        %v1367 = vmax.f32 %v1365, %v1366
        %v1368 = vrot.slane %v1367, 2
        %v1369 = vmax.f32 %v1367, %v1368
        %v1370 = vrot.slane %v1369, 1
        %v1371 = vmax.f32 %v1369, %v1370
        %v1372 = vsel %vm867, %v602, -inf
        %v1373 = vrot.slane %v1372, 4
        %v1374 = vmax.f32 %v1372, %v1373
        %v1375 = vrot.slane %v1374, 2
        %v1376 = vmax.f32 %v1374, %v1375
        %v1377 = vrot.slane %v1376, 1
        %v1378 = vmax.f32 %v1376, %v1377
        %v1379 = vsel %vm867, %v729, -inf
        %v1380 = vrot.slane %v1379, 4
        %v1381 = vmax.f32 %v1379, %v1380
        %v1382 = vrot.slane %v1381, 2
        %v1383 = vmax.f32 %v1381, %v1382
        %v1384 = vrot.slane %v1383, 1
        %v1385 = vmax.f32 %v1383, %v1384
        %v1386 = vsel %vm867, %v730, -inf
        %v1387 = vrot.slane %v1386, 4
        %v1388 = vmax.f32 %v1386, %v1387
        %v1389 = vrot.slane %v1388, 2
        %v1390 = vmax.f32 %v1388, %v1389
        %v1391 = vrot.slane %v1390, 1
        %v1392 = vmax.f32 %v1390, %v1391
        %v1393 = vsel %vm867, %v731, -inf
        %v1394 = vrot.slane %v1393, 4
        %v1395 = vmax.f32 %v1393, %v1394
        %v1396 = vrot.slane %v1395, 2
        %v1397 = vmax.f32 %v1395, %v1396
        %v1398 = vrot.slane %v1397, 1
        %v1399 = vmax.f32 %v1397, %v1398
        %v1400 = vsel %vm867, %v605, -inf
        %v1401 = vrot.slane %v1400, 4
        %v1402 = vmax.f32 %v1400, %v1401
        %v1403 = vrot.slane %v1402, 2
        %v1404 = vmax.f32 %v1402, %v1403
        %v1405 = vrot.slane %v1404, 1
        %v1406 = vmax.f32 %v1404, %v1405
        %v1407 = vsel %vm867, %v732, -inf
        %v1408 = vrot.slane %v1407, 4
        %v1409 = vmax.f32 %v1407, %v1408
        %v1410 = vrot.slane %v1409, 2
        %v1411 = vmax.f32 %v1409, %v1410
        %v1412 = vrot.slane %v1411, 1
        %v1413 = vmax.f32 %v1411, %v1412
        %v1414 = vsel %vm867, %v733, -inf
        %v1415 = vrot.slane %v1414, 4
        %v1416 = vmax.f32 %v1414, %v1415
        %v1417 = vrot.slane %v1416, 2
        %v1418 = vmax.f32 %v1416, %v1417
        %v1419 = vrot.slane %v1418, 1
        %v1420 = vmax.f32 %v1418, %v1419
        %v1421 = vsel %vm867, %v734, -inf
        %v1422 = vrot.slane %v1421, 4
        %v1423 = vmax.f32 %v1421, %v1422
        %v1424 = vrot.slane %v1423, 2
        %v1425 = vmax.f32 %v1423, %v1424
        %v1426 = vrot.slane %v1425, 1
        %v1427 = vmax.f32 %v1425, %v1426
        %v1428 = vsel %vm867, %v608, -inf
        %v1429 = vrot.slane %v1428, 4
        %v1430 = vmax.f32 %v1428, %v1429
        %v1431 = vrot.slane %v1430, 2
        %v1432 = vmax.f32 %v1430, %v1431
        %v1433 = vrot.slane %v1432, 1
        %v1434 = vmax.f32 %v1432, %v1433
        %v1435 = vsel %vm867, %v735, -inf
        %v1436 = vrot.slane %v1435, 4
        %v1437 = vmax.f32 %v1435, %v1436
        %v1438 = vrot.slane %v1437, 2
        %v1439 = vmax.f32 %v1437, %v1438
        %v1440 = vrot.slane %v1439, 1
        %v1441 = vmax.f32 %v1439, %v1440
        %v1442 = vsel %vm867, %v736, -inf
        %v1443 = vrot.slane %v1442, 4
        %v1444 = vmax.f32 %v1442, %v1443
        %v1445 = vrot.slane %v1444, 2
        %v1446 = vmax.f32 %v1444, %v1445
        %v1447 = vrot.slane %v1446, 1
        %v1448 = vmax.f32 %v1446, %v1447
        %v1449 = vsel %vm867, %v737, -inf
        %v1450 = vrot.slane %v1449, 4
        %v1451 = vmax.f32 %v1449, %v1450
        %v1452 = vrot.slane %v1451, 2
        %v1453 = vmax.f32 %v1451, %v1452
        %v1454 = vrot.slane %v1453, 1
        %v1455 = vmax.f32 %v1453, %v1454
        %v1456 = vsel %vm867, %v611, -inf
        %v1457 = vrot.slane %v1456, 4
        %v1458 = vmax.f32 %v1456, %v1457
        %v1459 = vrot.slane %v1458, 2
        %v1460 = vmax.f32 %v1458, %v1459
        %v1461 = vrot.slane %v1460, 1
        %v1462 = vmax.f32 %v1460, %v1461
        %v1463 = vsel %vm867, %v738, -inf
        %v1464 = vrot.slane %v1463, 4
        %v1465 = vmax.f32 %v1463, %v1464
        %v1466 = vrot.slane %v1465, 2
        %v1467 = vmax.f32 %v1465, %v1466
        %v1468 = vrot.slane %v1467, 1
        %v1469 = vmax.f32 %v1467, %v1468
        %v1470 = vsel %vm867, %v739, -inf
        %v1471 = vrot.slane %v1470, 4
        %v1472 = vmax.f32 %v1470, %v1471
        %v1473 = vrot.slane %v1472, 2
        %v1474 = vmax.f32 %v1472, %v1473
        %v1475 = vrot.slane %v1474, 1
        %v1476 = vmax.f32 %v1474, %v1475
        %v1477 = vsel %vm867, %v740, -inf
        %v1478 = vrot.slane %v1477, 4
        %v1479 = vmax.f32 %v1477, %v1478
        %v1480 = vrot.slane %v1479, 2
        %v1481 = vmax.f32 %v1479, %v1480
        %v1482 = vrot.slane %v1481, 1
        %v1483 = vmax.f32 %v1481, %v1482
        %v1484 = vsel %vm867, %v614, -inf
        %v1485 = vrot.slane %v1484, 4
        %v1486 = vmax.f32 %v1484, %v1485
        %v1487 = vrot.slane %v1486, 2
        %v1488 = vmax.f32 %v1486, %v1487
        %v1489 = vrot.slane %v1488, 1
        %v1490 = vmax.f32 %v1488, %v1489
        %v1491 = vsel %vm867, %v741, -inf
        %v1492 = vrot.slane %v1491, 4
        %v1493 = vmax.f32 %v1491, %v1492
        %v1494 = vrot.slane %v1493, 2
        %v1495 = vmax.f32 %v1493, %v1494
        %v1496 = vrot.slane %v1495, 1
        %v1497 = vmax.f32 %v1495, %v1496
        %v1498 = vsel %vm867, %v742, -inf
        %v1499 = vrot.slane %v1498, 4
        %v1500 = vmax.f32 %v1498, %v1499
        %v1501 = vrot.slane %v1500, 2
        %v1502 = vmax.f32 %v1500, %v1501
        %v1503 = vrot.slane %v1502, 1
        %v1504 = vmax.f32 %v1502, %v1503
        %v1505 = vsel %vm867, %v743, -inf
        %v1506 = vrot.slane %v1505, 4
        %v1507 = vmax.f32 %v1505, %v1506
        %v1508 = vrot.slane %v1507, 2
        %v1509 = vmax.f32 %v1507, %v1508
        %v1510 = vrot.slane %v1509, 1
        %v1511 = vmax.f32 %v1509, %v1510
        %v1512 = vsel %vm867, %v617, -inf
        %v1513 = vrot.slane %v1512, 4
        %v1514 = vmax.f32 %v1512, %v1513
        %v1515 = vrot.slane %v1514, 2
        %v1516 = vmax.f32 %v1514, %v1515
        %v1517 = vrot.slane %v1516, 1
        %v1518 = vmax.f32 %v1516, %v1517
        %v1519 = vsel %vm867, %v744, -inf
        %v1520 = vrot.slane %v1519, 4
        %v1521 = vmax.f32 %v1519, %v1520
        %v1522 = vrot.slane %v1521, 2
        %v1523 = vmax.f32 %v1521, %v1522
        %v1524 = vrot.slane %v1523, 1
        %v1525 = vmax.f32 %v1523, %v1524
        %v1526 = vsel %vm867, %v745, -inf
        %v1527 = vrot.slane %v1526, 4
        %v1528 = vmax.f32 %v1526, %v1527
        %v1529 = vrot.slane %v1528, 2
        %v1530 = vmax.f32 %v1528, %v1529
        %v1531 = vrot.slane %v1530, 1
        %v1532 = vmax.f32 %v1530, %v1531
        %v1533 = vsel %vm867, %v746, -inf
        %v1534 = vrot.slane %v1533, 4
        %v1535 = vmax.f32 %v1533, %v1534
        %v1536 = vrot.slane %v1535, 2
        %v1537 = vmax.f32 %v1535, %v1536
        %v1538 = vrot.slane %v1537, 1
        %v1539 = vmax.f32 %v1537, %v1538
        %v1540 = vsel %vm867, %v620, -inf
        %v1541 = vrot.slane %v1540, 4
        %v1542 = vmax.f32 %v1540, %v1541
        %v1543 = vrot.slane %v1542, 2
        %v1544 = vmax.f32 %v1542, %v1543
        %v1545 = vrot.slane %v1544, 1
        %v1546 = vmax.f32 %v1544, %v1545
        %v1547 = vsel %vm867, %v747, -inf
        %v1548 = vrot.slane %v1547, 4
        %v1549 = vmax.f32 %v1547, %v1548
        %v1550 = vrot.slane %v1549, 2
        %v1551 = vmax.f32 %v1549, %v1550
        %v1552 = vrot.slane %v1551, 1
        %v1553 = vmax.f32 %v1551, %v1552
        %v1554 = vsel %vm867, %v748, -inf
        %v1555 = vrot.slane %v1554, 4
        %v1556 = vmax.f32 %v1554, %v1555
        %v1557 = vrot.slane %v1556, 2
        %v1558 = vmax.f32 %v1556, %v1557
        %v1559 = vrot.slane %v1558, 1
        %v1560 = vmax.f32 %v1558, %v1559
        %v1561 = vsel %vm867, %v749, -inf
        %v1562 = vrot.slane %v1561, 4
        %v1563 = vmax.f32 %v1561, %v1562
        %v1564 = vrot.slane %v1563, 2
        %v1565 = vmax.f32 %v1563, %v1564
        %v1566 = vrot.slane %v1565, 1
        %v1567 = vmax.f32 %v1565, %v1566
        %v1568 = vsel %vm867, %v623, -inf
        %v1569 = vrot.slane %v1568, 4
        %v1570 = vmax.f32 %v1568, %v1569
        %v1571 = vrot.slane %v1570, 2
        %v1572 = vmax.f32 %v1570, %v1571
        %v1573 = vrot.slane %v1572, 1
        %v1574 = vmax.f32 %v1572, %v1573
        %v1575 = vsel %vm867, %v750, -inf
        %v1576 = vrot.slane %v1575, 4
        %v1577 = vmax.f32 %v1575, %v1576
        %v1578 = vrot.slane %v1577, 2
        %v1579 = vmax.f32 %v1577, %v1578
        %v1580 = vrot.slane %v1579, 1
        %v1581 = vmax.f32 %v1579, %v1580
        %v1582 = vsel %vm867, %v751, -inf
        %v1583 = vrot.slane %v1582, 4
        %v1584 = vmax.f32 %v1582, %v1583
        %v1585 = vrot.slane %v1584, 2
        %v1586 = vmax.f32 %v1584, %v1585
        %v1587 = vrot.slane %v1586, 1
        %v1588 = vmax.f32 %v1586, %v1587
        %v1589 = vsel %vm867, %v752, -inf
        %v1590 = vrot.slane %v1589, 4
        %v1591 = vmax.f32 %v1589, %v1590
        %v1592 = vrot.slane %v1591, 2
        %v1593 = vmax.f32 %v1591, %v1592
        %v1594 = vrot.slane %v1593, 1
        %v1595 = vmax.f32 %v1593, %v1594
        %v1596 = vsel %vm867, %v626, -inf
        %v1597 = vrot.slane %v1596, 4
        %v1598 = vmax.f32 %v1596, %v1597
        %v1599 = vrot.slane %v1598, 2
        %v1600 = vmax.f32 %v1598, %v1599
        %v1601 = vrot.slane %v1600, 1
        %v1602 = vmax.f32 %v1600, %v1601
        %v1603 = vsel %vm867, %v753, -inf
        %v1604 = vrot.slane %v1603, 4
        %v1605 = vmax.f32 %v1603, %v1604
        %v1606 = vrot.slane %v1605, 2
        %v1607 = vmax.f32 %v1605, %v1606
        %v1608 = vrot.slane %v1607, 1
        %v1609 = vmax.f32 %v1607, %v1608
        %v1610 = vsel %vm867, %v754, -inf
        %v1611 = vrot.slane %v1610, 4
        %v1612 = vmax.f32 %v1610, %v1611
        %v1613 = vrot.slane %v1612, 2
        %v1614 = vmax.f32 %v1612, %v1613
        %v1615 = vrot.slane %v1614, 1
        %v1616 = vmax.f32 %v1614, %v1615
        %v1617 = vsel %vm867, %v755, -inf
        %v1618 = vrot.slane %v1617, 4
        %v1619 = vmax.f32 %v1617, %v1618
        %v1620 = vrot.slane %v1619, 2
        %v1621 = vmax.f32 %v1619, %v1620
        %v1622 = vrot.slane %v1621, 1
        %v1623 = vmax.f32 %v1621, %v1622
        %v1624 = vsel %vm867, %v629, -inf
        %v1625 = vrot.slane %v1624, 4
        %v1626 = vmax.f32 %v1624, %v1625
        %v1627 = vrot.slane %v1626, 2
        %v1628 = vmax.f32 %v1626, %v1627
        %v1629 = vrot.slane %v1628, 1
        %v1630 = vmax.f32 %v1628, %v1629
        %v1631 = vsel %vm867, %v756, -inf
        %v1632 = vrot.slane %v1631, 4
        %v1633 = vmax.f32 %v1631, %v1632
        %v1634 = vrot.slane %v1633, 2
        %v1635 = vmax.f32 %v1633, %v1634
        %v1636 = vrot.slane %v1635, 1
        %v1637 = vmax.f32 %v1635, %v1636
        %v1638 = vsel %vm867, %v757, -inf
        %v1639 = vrot.slane %v1638, 4
        %v1640 = vmax.f32 %v1638, %v1639
        %v1641 = vrot.slane %v1640, 2
        %v1642 = vmax.f32 %v1640, %v1641
        %v1643 = vrot.slane %v1642, 1
        %v1644 = vmax.f32 %v1642, %v1643
        %v1645 = vsel %vm867, %v758, -inf
        %v1646 = vrot.slane %v1645, 4
        %v1647 = vmax.f32 %v1645, %v1646
        %v1648 = vrot.slane %v1647, 2
        %v1649 = vmax.f32 %v1647, %v1648
        %v1650 = vrot.slane %v1649, 1
        %v1651 = vmax.f32 %v1649, %v1650
        %v1652 = vsel %vm867, %v632, -inf
        %v1653 = vrot.slane %v1652, 4
        %v1654 = vmax.f32 %v1652, %v1653
        %v1655 = vrot.slane %v1654, 2
        %v1656 = vmax.f32 %v1654, %v1655
        %v1657 = vrot.slane %v1656, 1
        %v1658 = vmax.f32 %v1656, %v1657
        %v1659 = vsel %vm867, %v759, -inf
        %v1660 = vrot.slane %v1659, 4
        %v1661 = vmax.f32 %v1659, %v1660
        %v1662 = vrot.slane %v1661, 2
        %v1663 = vmax.f32 %v1661, %v1662
        %v1664 = vrot.slane %v1663, 1
        %v1665 = vmax.f32 %v1663, %v1664
        %v1666 = vsel %vm867, %v760, -inf
        %v1667 = vrot.slane %v1666, 4
        %v1668 = vmax.f32 %v1666, %v1667
        %v1669 = vrot.slane %v1668, 2
        %v1670 = vmax.f32 %v1668, %v1669
        %v1671 = vrot.slane %v1670, 1
        %v1672 = vmax.f32 %v1670, %v1671
        %v1673 = vsel %vm867, %v761, -inf
        %v1674 = vrot.slane %v1673, 4
        %v1675 = vmax.f32 %v1673, %v1674
        %v1676 = vrot.slane %v1675, 2
        %v1677 = vmax.f32 %v1675, %v1676
        %v1678 = vrot.slane %v1677, 1
        %v1679 = vmax.f32 %v1677, %v1678
        %v1680 = vsel %vm867, %v635, -inf
        %v1681 = vrot.slane %v1680, 4
        %v1682 = vmax.f32 %v1680, %v1681
        %v1683 = vrot.slane %v1682, 2
        %v1684 = vmax.f32 %v1682, %v1683
        %v1685 = vrot.slane %v1684, 1
        %v1686 = vmax.f32 %v1684, %v1685
        %v1687 = vsel %vm867, %v762, -inf
        %v1688 = vrot.slane %v1687, 4
        %v1689 = vmax.f32 %v1687, %v1688
        %v1690 = vrot.slane %v1689, 2
        %v1691 = vmax.f32 %v1689, %v1690
        %v1692 = vrot.slane %v1691, 1
        %v1693 = vmax.f32 %v1691, %v1692
        %v1694 = vsel %vm867, %v763, -inf
        %v1695 = vrot.slane %v1694, 4
        %v1696 = vmax.f32 %v1694, %v1695
        %v1697 = vrot.slane %v1696, 2
        %v1698 = vmax.f32 %v1696, %v1697
        %v1699 = vrot.slane %v1698, 1
        %v1700 = vmax.f32 %v1698, %v1699
        %v1701 = vsel %vm867, %v764, -inf
        %v1702 = vrot.slane %v1701, 4
        %v1703 = vmax.f32 %v1701, %v1702
        %v1704 = vrot.slane %v1703, 2
        %v1705 = vmax.f32 %v1703, %v1704
        %v1706 = vrot.slane %v1705, 1
        %v1707 = vmax.f32 %v1705, %v1706
        %v1708 = vsel %vm867, %v638, -inf
        %v1709 = vrot.slane %v1708, 4
        %v1710 = vmax.f32 %v1708, %v1709
        %v1711 = vrot.slane %v1710, 2
        %v1712 = vmax.f32 %v1710, %v1711
        %v1713 = vrot.slane %v1712, 1
        %v1714 = vmax.f32 %v1712, %v1713
        %v1715 = vsel %vm867, %v765, -inf
        %v1716 = vrot.slane %v1715, 4
        %v1717 = vmax.f32 %v1715, %v1716
        %v1718 = vrot.slane %v1717, 2
        %v1719 = vmax.f32 %v1717, %v1718
        %v1720 = vrot.slane %v1719, 1
        %v1721 = vmax.f32 %v1719, %v1720
        %v1722 = vsel %vm867, %v766, -inf
        %v1723 = vrot.slane %v1722, 4
        %v1724 = vmax.f32 %v1722, %v1723
        %v1725 = vrot.slane %v1724, 2
        %v1726 = vmax.f32 %v1724, %v1725
        %v1727 = vrot.slane %v1726, 1
        %v1728 = vmax.f32 %v1726, %v1727
        %v1729 = vsel %vm867, %v767, -inf
        %v1730 = vrot.slane %v1729, 4
        %v1731 = vmax.f32 %v1729, %v1730
        %v1732 = vrot.slane %v1731, 2
        %v1733 = vmax.f32 %v1731, %v1732
        %v1734 = vrot.slane %v1733, 1
        %v1735 = vmax.f32 %v1733, %v1734
        %v1736 = vsel %vm867, %v641, -inf
        %v1737 = vrot.slane %v1736, 4
        %v1738 = vmax.f32 %v1736, %v1737
        %v1739 = vrot.slane %v1738, 2
        %v1740 = vmax.f32 %v1738, %v1739
        %v1741 = vrot.slane %v1740, 1
        %v1742 = vmax.f32 %v1740, %v1741
        %v1743 = vsel %vm867, %v768, -inf
        %v1744 = vrot.slane %v1743, 4
        %v1745 = vmax.f32 %v1743, %v1744
        %v1746 = vrot.slane %v1745, 2
        %v1747 = vmax.f32 %v1745, %v1746
        %v1748 = vrot.slane %v1747, 1
        %v1749 = vmax.f32 %v1747, %v1748
        %v1750 = vsel %vm867, %v769, -inf
        %v1751 = vrot.slane %v1750, 4
        %v1752 = vmax.f32 %v1750, %v1751
        %v1753 = vrot.slane %v1752, 2
        %v1754 = vmax.f32 %v1752, %v1753
        %v1755 = vrot.slane %v1754, 1
        %v1756 = vmax.f32 %v1754, %v1755
        %v1757 = vsel %vm867, %v770, -inf
        %v1758 = vrot.slane %v1757, 4
        %v1759 = vmax.f32 %v1757, %v1758
        %v1760 = vrot.slane %v1759, 2
        %v1761 = vmax.f32 %v1759, %v1760
        %v1762 = vrot.slane %v1761, 1
        %v1763 = vmax.f32 %v1761, %v1762
        %v1764 = vld [vmem:[%s4] sm:$0x1]
        %v1766 = vperm.slane %v1764, 0
        %v1768 = vadd.f32 %v874, %v1766
        %v1769 = vadd.f32 %v881, %v1766
        %v1770 = vadd.f32 %v888, %v1766
        %v1771 = vadd.f32 %v895, %v1766
        %v1772 = vadd.f32 %v902, %v1766
        %v1773 = vadd.f32 %v909, %v1766
        %v1774 = vadd.f32 %v916, %v1766
        %v1775 = vadd.f32 %v923, %v1766
        %v1776 = vadd.f32 %v930, %v1766
        %v1777 = vadd.f32 %v937, %v1766
        %v1778 = vadd.f32 %v944, %v1766
        %v1779 = vadd.f32 %v951, %v1766
        %v1780 = vadd.f32 %v958, %v1766
        %v1781 = vadd.f32 %v965, %v1766
        %v1782 = vadd.f32 %v972, %v1766
        %v1783 = vadd.f32 %v979, %v1766
        %v1784 = vadd.f32 %v986, %v1766
        %v1785 = vadd.f32 %v993, %v1766
        %v1786 = vadd.f32 %v1000, %v1766
        %v1787 = vadd.f32 %v1007, %v1766
        %v1788 = vadd.f32 %v1014, %v1766
        %v1789 = vadd.f32 %v1021, %v1766
        %v1790 = vadd.f32 %v1028, %v1766
        %v1791 = vadd.f32 %v1035, %v1766
        %v1792 = vadd.f32 %v1042, %v1766
        %v1793 = vadd.f32 %v1049, %v1766
        %v1794 = vadd.f32 %v1056, %v1766
        %v1795 = vadd.f32 %v1063, %v1766
        %v1796 = vadd.f32 %v1070, %v1766
        %v1797 = vadd.f32 %v1077, %v1766
        %v1798 = vadd.f32 %v1084, %v1766
        %v1799 = vadd.f32 %v1091, %v1766
        %v1800 = vadd.f32 %v1098, %v1766
        %v1801 = vadd.f32 %v1105, %v1766
        %v1802 = vadd.f32 %v1112, %v1766
        %v1803 = vadd.f32 %v1119, %v1766
        %v1804 = vadd.f32 %v1126, %v1766
        %v1805 = vadd.f32 %v1133, %v1766
        %v1806 = vadd.f32 %v1140, %v1766
        %v1807 = vadd.f32 %v1147, %v1766
        %v1808 = vadd.f32 %v1154, %v1766
        %v1809 = vadd.f32 %v1161, %v1766
        %v1810 = vadd.f32 %v1168, %v1766
        %v1811 = vadd.f32 %v1175, %v1766
        %v1812 = vadd.f32 %v1182, %v1766
        %v1813 = vadd.f32 %v1189, %v1766
        %v1814 = vadd.f32 %v1196, %v1766
        %v1815 = vadd.f32 %v1203, %v1766
        %v1816 = vadd.f32 %v1210, %v1766
        %v1817 = vadd.f32 %v1217, %v1766
        %v1818 = vadd.f32 %v1224, %v1766
        %v1819 = vadd.f32 %v1231, %v1766
        %v1820 = vadd.f32 %v1238, %v1766
        %v1821 = vadd.f32 %v1245, %v1766
        %v1822 = vadd.f32 %v1252, %v1766
        %v1823 = vadd.f32 %v1259, %v1766
        %v1824 = vadd.f32 %v1266, %v1766
        %v1825 = vadd.f32 %v1273, %v1766
        %v1826 = vadd.f32 %v1280, %v1766
        %v1827 = vadd.f32 %v1287, %v1766
        %v1828 = vadd.f32 %v1294, %v1766
        %v1829 = vadd.f32 %v1301, %v1766
        %v1830 = vadd.f32 %v1308, %v1766
        %v1831 = vadd.f32 %v1315, %v1766
        %v1832 = vadd.f32 %v1322, %v1766
        %v1833 = vadd.f32 %v1329, %v1766
        %v1834 = vadd.f32 %v1336, %v1766
        %v1835 = vadd.f32 %v1343, %v1766
        %v1836 = vadd.f32 %v1350, %v1766
        %v1837 = vadd.f32 %v1357, %v1766
        %v1838 = vadd.f32 %v1364, %v1766
        %v1839 = vadd.f32 %v1371, %v1766
        %v1840 = vadd.f32 %v1378, %v1766
        %v1841 = vadd.f32 %v1385, %v1766
        %v1842 = vadd.f32 %v1392, %v1766
        %v1843 = vadd.f32 %v1399, %v1766
        %v1844 = vadd.f32 %v1406, %v1766
        %v1845 = vadd.f32 %v1413, %v1766
        %v1846 = vadd.f32 %v1420, %v1766
        %v1847 = vadd.f32 %v1427, %v1766
        %v1848 = vadd.f32 %v1434, %v1766
        %v1849 = vadd.f32 %v1441, %v1766
        %v1850 = vadd.f32 %v1448, %v1766
        %v1851 = vadd.f32 %v1455, %v1766
        %v1852 = vadd.f32 %v1462, %v1766
        %v1853 = vadd.f32 %v1469, %v1766
        %v1854 = vadd.f32 %v1476, %v1766
        %v1855 = vadd.f32 %v1483, %v1766
        %v1856 = vadd.f32 %v1490, %v1766
        %v1857 = vadd.f32 %v1497, %v1766
        %v1858 = vadd.f32 %v1504, %v1766
        %v1859 = vadd.f32 %v1511, %v1766
        %v1860 = vadd.f32 %v1518, %v1766
        %v1861 = vadd.f32 %v1525, %v1766
        %v1862 = vadd.f32 %v1532, %v1766
        %v1863 = vadd.f32 %v1539, %v1766
        %v1864 = vadd.f32 %v1546, %v1766
        %v1865 = vadd.f32 %v1553, %v1766
        %v1866 = vadd.f32 %v1560, %v1766
        %v1867 = vadd.f32 %v1567, %v1766
        %v1868 = vadd.f32 %v1574, %v1766
        %v1869 = vadd.f32 %v1581, %v1766
        %v1870 = vadd.f32 %v1588, %v1766
        %v1871 = vadd.f32 %v1595, %v1766
        %v1872 = vadd.f32 %v1602, %v1766
        %v1873 = vadd.f32 %v1609, %v1766
        %v1874 = vadd.f32 %v1616, %v1766
        %v1875 = vadd.f32 %v1623, %v1766
        %v1876 = vadd.f32 %v1630, %v1766
        %v1877 = vadd.f32 %v1637, %v1766
        %v1878 = vadd.f32 %v1644, %v1766
        %v1879 = vadd.f32 %v1651, %v1766
        %v1880 = vadd.f32 %v1658, %v1766
        %v1881 = vadd.f32 %v1665, %v1766
        %v1882 = vadd.f32 %v1672, %v1766
        %v1883 = vadd.f32 %v1679, %v1766
        %v1884 = vadd.f32 %v1686, %v1766
        %v1885 = vadd.f32 %v1693, %v1766
        %v1886 = vadd.f32 %v1700, %v1766
        %v1887 = vadd.f32 %v1707, %v1766
        %v1888 = vadd.f32 %v1714, %v1766
        %v1889 = vadd.f32 %v1721, %v1766
        %v1890 = vadd.f32 %v1728, %v1766
        %v1891 = vadd.f32 %v1735, %v1766
        %v1892 = vadd.f32 %v1742, %v1766
        %v1893 = vadd.f32 %v1749, %v1766
        %v1894 = vadd.f32 %v1756, %v1766
        %v1895 = vadd.f32 %v1763, %v1766
        %v2024 = vrot.slane %v1769, 7
        %vm2025 = vcmask 1041409
        %v2026 = vsel %vm2025, %v2024, %v1768
        %v2027 = vrot.slane %v1770, 6
        %vm2028 = vcmask 1042434
        %v2029 = vsel %vm2028, %v2027, %v2026
        %v2030 = vrot.slane %v1771, 5
        %vm2031 = vcmask 1043459
        %v2032 = vsel %vm2031, %v2030, %v2029
        %v2033 = vrot.slane %v1772, 4
        %vm2034 = vcmask 1044484
        %v2035 = vsel %vm2034, %v2033, %v2032
        %v2036 = vrot.slane %v1773, 3
        %vm2037 = vcmask 1045509
        %v2038 = vsel %vm2037, %v2036, %v2035
        %v2039 = vrot.slane %v1774, 2
        %vm2040 = vcmask 1046534
        %v2041 = vsel %vm2040, %v2039, %v2038
        %v2042 = vrot.slane %v1775, 1
        %vm2043 = vcmask 1047559
        %v2044 = vsel %vm2043, %v2042, %v2041
        %v2045 = vrot.slane %v1777, 7
        %v2046 = vsel %vm2025, %v2045, %v1776
        %v2047 = vrot.slane %v1778, 6
        %v2048 = vsel %vm2028, %v2047, %v2046
        %v2049 = vrot.slane %v1779, 5
        %v2050 = vsel %vm2031, %v2049, %v2048
        %v2051 = vrot.slane %v1780, 4
        %v2052 = vsel %vm2034, %v2051, %v2050
        %v2053 = vrot.slane %v1781, 3
        %v2054 = vsel %vm2037, %v2053, %v2052
        %v2055 = vrot.slane %v1782, 2
        %v2056 = vsel %vm2040, %v2055, %v2054
        %v2057 = vrot.slane %v1783, 1
        %v2058 = vsel %vm2043, %v2057, %v2056
        %v2059 = vrot.slane %v1785, 7
        %v2060 = vsel %vm2025, %v2059, %v1784
        %v2061 = vrot.slane %v1786, 6
        %v2062 = vsel %vm2028, %v2061, %v2060
        %v2063 = vrot.slane %v1787, 5
        %v2064 = vsel %vm2031, %v2063, %v2062
        %v2065 = vrot.slane %v1788, 4
        %v2066 = vsel %vm2034, %v2065, %v2064
        %v2067 = vrot.slane %v1789, 3
        %v2068 = vsel %vm2037, %v2067, %v2066
        %v2069 = vrot.slane %v1790, 2
        %v2070 = vsel %vm2040, %v2069, %v2068
        %v2071 = vrot.slane %v1791, 1
        %v2072 = vsel %vm2043, %v2071, %v2070
        %v2073 = vrot.slane %v1793, 7
        %v2074 = vsel %vm2025, %v2073, %v1792
        %v2075 = vrot.slane %v1794, 6
        %v2076 = vsel %vm2028, %v2075, %v2074
        %v2077 = vrot.slane %v1795, 5
        %v2078 = vsel %vm2031, %v2077, %v2076
        %v2079 = vrot.slane %v1796, 4
        %v2080 = vsel %vm2034, %v2079, %v2078
        %v2081 = vrot.slane %v1797, 3
        %v2082 = vsel %vm2037, %v2081, %v2080
        %v2083 = vrot.slane %v1798, 2
        %v2084 = vsel %vm2040, %v2083, %v2082
        %v2085 = vrot.slane %v1799, 1
        %v2086 = vsel %vm2043, %v2085, %v2084
        %v2087 = vrot.slane %v1801, 7
        %v2088 = vsel %vm2025, %v2087, %v1800
        %v2089 = vrot.slane %v1802, 6
        %v2090 = vsel %vm2028, %v2089, %v2088
        %v2091 = vrot.slane %v1803, 5
        %v2092 = vsel %vm2031, %v2091, %v2090
        %v2093 = vrot.slane %v1804, 4
        %v2094 = vsel %vm2034, %v2093, %v2092
        %v2095 = vrot.slane %v1805, 3
        %v2096 = vsel %vm2037, %v2095, %v2094
        %v2097 = vrot.slane %v1806, 2
        %v2098 = vsel %vm2040, %v2097, %v2096
        %v2099 = vrot.slane %v1807, 1
        %v2100 = vsel %vm2043, %v2099, %v2098
        %v2101 = vrot.slane %v1809, 7
        %v2102 = vsel %vm2025, %v2101, %v1808
        %v2103 = vrot.slane %v1810, 6
        %v2104 = vsel %vm2028, %v2103, %v2102
        %v2105 = vrot.slane %v1811, 5
        %v2106 = vsel %vm2031, %v2105, %v2104
        %v2107 = vrot.slane %v1812, 4
        %v2108 = vsel %vm2034, %v2107, %v2106
        %v2109 = vrot.slane %v1813, 3
        %v2110 = vsel %vm2037, %v2109, %v2108
        %v2111 = vrot.slane %v1814, 2
        %v2112 = vsel %vm2040, %v2111, %v2110
        %v2113 = vrot.slane %v1815, 1
        %v2114 = vsel %vm2043, %v2113, %v2112
        %v2115 = vrot.slane %v1817, 7
        %v2116 = vsel %vm2025, %v2115, %v1816
        %v2117 = vrot.slane %v1818, 6
        %v2118 = vsel %vm2028, %v2117, %v2116
        %v2119 = vrot.slane %v1819, 5
        %v2120 = vsel %vm2031, %v2119, %v2118
        %v2121 = vrot.slane %v1820, 4
        %v2122 = vsel %vm2034, %v2121, %v2120
        %v2123 = vrot.slane %v1821, 3
        %v2124 = vsel %vm2037, %v2123, %v2122
        %v2125 = vrot.slane %v1822, 2
        %v2126 = vsel %vm2040, %v2125, %v2124
        %v2127 = vrot.slane %v1823, 1
        %v2128 = vsel %vm2043, %v2127, %v2126
        %v2129 = vrot.slane %v1825, 7
        %v2130 = vsel %vm2025, %v2129, %v1824
        %v2131 = vrot.slane %v1826, 6
        %v2132 = vsel %vm2028, %v2131, %v2130
        %v2133 = vrot.slane %v1827, 5
        %v2134 = vsel %vm2031, %v2133, %v2132
        %v2135 = vrot.slane %v1828, 4
        %v2136 = vsel %vm2034, %v2135, %v2134
        %v2137 = vrot.slane %v1829, 3
        %v2138 = vsel %vm2037, %v2137, %v2136
        %v2139 = vrot.slane %v1830, 2
        %v2140 = vsel %vm2040, %v2139, %v2138
        %v2141 = vrot.slane %v1831, 1
        %v2142 = vsel %vm2043, %v2141, %v2140
        %v2143 = vrot.slane %v1833, 7
        %v2144 = vsel %vm2025, %v2143, %v1832
        %v2145 = vrot.slane %v1834, 6
        %v2146 = vsel %vm2028, %v2145, %v2144
        %v2147 = vrot.slane %v1835, 5
        %v2148 = vsel %vm2031, %v2147, %v2146
        %v2149 = vrot.slane %v1836, 4
        %v2150 = vsel %vm2034, %v2149, %v2148
        %v2151 = vrot.slane %v1837, 3
        %v2152 = vsel %vm2037, %v2151, %v2150
        %v2153 = vrot.slane %v1838, 2
        %v2154 = vsel %vm2040, %v2153, %v2152
        %v2155 = vrot.slane %v1839, 1
        %v2156 = vsel %vm2043, %v2155, %v2154
        %v2157 = vrot.slane %v1841, 7
        %v2158 = vsel %vm2025, %v2157, %v1840
        %v2159 = vrot.slane %v1842, 6
        %v2160 = vsel %vm2028, %v2159, %v2158
        %v2161 = vrot.slane %v1843, 5
        %v2162 = vsel %vm2031, %v2161, %v2160
        %v2163 = vrot.slane %v1844, 4
        %v2164 = vsel %vm2034, %v2163, %v2162
        %v2165 = vrot.slane %v1845, 3
        %v2166 = vsel %vm2037, %v2165, %v2164
        %v2167 = vrot.slane %v1846, 2
        %v2168 = vsel %vm2040, %v2167, %v2166
        %v2169 = vrot.slane %v1847, 1
        %v2170 = vsel %vm2043, %v2169, %v2168
        %v2171 = vrot.slane %v1849, 7
        %v2172 = vsel %vm2025, %v2171, %v1848
        %v2173 = vrot.slane %v1850, 6
        %v2174 = vsel %vm2028, %v2173, %v2172
        %v2175 = vrot.slane %v1851, 5
        %v2176 = vsel %vm2031, %v2175, %v2174
        %v2177 = vrot.slane %v1852, 4
        %v2178 = vsel %vm2034, %v2177, %v2176
        %v2179 = vrot.slane %v1853, 3
        %v2180 = vsel %vm2037, %v2179, %v2178
        %v2181 = vrot.slane %v1854, 2
        %v2182 = vsel %vm2040, %v2181, %v2180
        %v2183 = vrot.slane %v1855, 1
        %v2184 = vsel %vm2043, %v2183, %v2182
        %v2185 = vrot.slane %v1857, 7
        %v2186 = vsel %vm2025, %v2185, %v1856
        %v2187 = vrot.slane %v1858, 6
        %v2188 = vsel %vm2028, %v2187, %v2186
        %v2189 = vrot.slane %v1859, 5
        %v2190 = vsel %vm2031, %v2189, %v2188
        %v2191 = vrot.slane %v1860, 4
        %v2192 = vsel %vm2034, %v2191, %v2190
        %v2193 = vrot.slane %v1861, 3
        %v2194 = vsel %vm2037, %v2193, %v2192
        %v2195 = vrot.slane %v1862, 2
        %v2196 = vsel %vm2040, %v2195, %v2194
        %v2197 = vrot.slane %v1863, 1
        %v2198 = vsel %vm2043, %v2197, %v2196
        %v2199 = vrot.slane %v1865, 7
        %v2200 = vsel %vm2025, %v2199, %v1864
        %v2201 = vrot.slane %v1866, 6
        %v2202 = vsel %vm2028, %v2201, %v2200
        %v2203 = vrot.slane %v1867, 5
        %v2204 = vsel %vm2031, %v2203, %v2202
        %v2205 = vrot.slane %v1868, 4
        %v2206 = vsel %vm2034, %v2205, %v2204
        %v2207 = vrot.slane %v1869, 3
        %v2208 = vsel %vm2037, %v2207, %v2206
        %v2209 = vrot.slane %v1870, 2
        %v2210 = vsel %vm2040, %v2209, %v2208
        %v2211 = vrot.slane %v1871, 1
        %v2212 = vsel %vm2043, %v2211, %v2210
        %v2213 = vrot.slane %v1873, 7
        %v2214 = vsel %vm2025, %v2213, %v1872
        %v2215 = vrot.slane %v1874, 6
        %v2216 = vsel %vm2028, %v2215, %v2214
        %v2217 = vrot.slane %v1875, 5
        %v2218 = vsel %vm2031, %v2217, %v2216
        %v2219 = vrot.slane %v1876, 4
        %v2220 = vsel %vm2034, %v2219, %v2218
        %v2221 = vrot.slane %v1877, 3
        %v2222 = vsel %vm2037, %v2221, %v2220
        %v2223 = vrot.slane %v1878, 2
        %v2224 = vsel %vm2040, %v2223, %v2222
        %v2225 = vrot.slane %v1879, 1
        %v2226 = vsel %vm2043, %v2225, %v2224
        %v2227 = vrot.slane %v1881, 7
        %v2228 = vsel %vm2025, %v2227, %v1880
        %v2229 = vrot.slane %v1882, 6
        %v2230 = vsel %vm2028, %v2229, %v2228
        %v2231 = vrot.slane %v1883, 5
        %v2232 = vsel %vm2031, %v2231, %v2230
        %v2233 = vrot.slane %v1884, 4
        %v2234 = vsel %vm2034, %v2233, %v2232
        %v2235 = vrot.slane %v1885, 3
        %v2236 = vsel %vm2037, %v2235, %v2234
        %v2237 = vrot.slane %v1886, 2
        %v2238 = vsel %vm2040, %v2237, %v2236
        %v2239 = vrot.slane %v1887, 1
        %v2240 = vsel %vm2043, %v2239, %v2238
        %v2241 = vrot.slane %v1889, 7
        %v2242 = vsel %vm2025, %v2241, %v1888
        %v2243 = vrot.slane %v1890, 6
        %v2244 = vsel %vm2028, %v2243, %v2242
        %v2245 = vrot.slane %v1891, 5
        %v2246 = vsel %vm2031, %v2245, %v2244
        %v2247 = vrot.slane %v1892, 4
        %v2248 = vsel %vm2034, %v2247, %v2246
        %v2249 = vrot.slane %v1893, 3
        %v2250 = vsel %vm2037, %v2249, %v2248
        %v2251 = vrot.slane %v1894, 2
        %v2252 = vsel %vm2040, %v2251, %v2250
        %v2253 = vrot.slane %v1895, 1
        %v2254 = vsel %vm2043, %v2253, %v2252
        %2271 = vxpose.xlu0.b32.start [1/16] %v2044, 128
        %2272 = vxpose.xlu0.b32.cont [2/16] %v2058, 128
        %2273 = vxpose.xlu0.b32.cont [3/16] %v2072, 128
        %2274 = vxpose.xlu0.b32.cont [4/16] %v2086, 128
        %2275 = vxpose.xlu0.b32.cont [5/16] %v2100, 128
        %2276 = vxpose.xlu0.b32.cont [6/16] %v2114, 128
        %2277 = vxpose.xlu0.b32.cont [7/16] %v2128, 128
        %2278 = vxpose.xlu0.b32.cont [8/16] %v2142, 128
        %2279 = vxpose.xlu0.b32.cont [9/16] %v2156, 128
        %2280 = vxpose.xlu0.b32.cont [10/16] %v2170, 128
        %2281 = vxpose.xlu0.b32.cont [11/16] %v2184, 128
        %2282 = vxpose.xlu0.b32.cont [12/16] %v2198, 128
        %2283 = vxpose.xlu0.b32.cont [13/16] %v2212, 128
        %2284 = vxpose.xlu0.b32.cont [14/16] %v2226, 128
        %2285 = vxpose.xlu0.b32.cont [15/16] %v2240, 128
        %2286 = vxpose.xlu0.b32.end [16/16] %v2254, 128
        %v2287 = vpop.trf.xlu0
        %v2288 = vpop.trf.xlu0
        %v2289 = vpop.trf.xlu0
        %v2290 = vpop.trf.xlu0
        %v2291 = vpop.trf.xlu0
        %v2292 = vpop.trf.xlu0
        %v2293 = vpop.trf.xlu0
        %v2294 = vpop.trf.xlu0
        %v2295 = vpop.trf.xlu0
        %v2296 = vpop.trf.xlu0
        %v2297 = vpop.trf.xlu0
        %v2298 = vpop.trf.xlu0
        %v2299 = vpop.trf.xlu0
        %v2300 = vpop.trf.xlu0
        %v2301 = vpop.trf.xlu0
        %v2302 = vpop.trf.xlu0
        %2303 = vst [vmem:[%s260] sm:$0xff] %v2287
        %2304 = vst [vmem:[%s260 + $0x8] sm:$0xff] %v2288
        %s2305 = sand.u32 %s156, 1
        %s2306 = scalar_lea.sflag [#allocation4], %s2305
        %s2307 = sand.u32 %s156, 1
        %s2308 = smul.addr %s2307, 16
        %s2309 = scalar_lea.vmem [#allocation5], %s2308
        // Predicated region
        $region45: #{tpu_custom_call.1} parent=39 // pred_check
          %p2310 = pneg %p166
        $region46: #{tpu_custom_call.1} parent=39 // pred_check_branch
          %2312 = sbr.rel (%p2310) target = $region48
        $region47: #{tpu_custom_call.1} parent=39 // pred_region
          %2314 = vsyncadd %s2306, 0
          %s2315 = smul.addr %s26, 8
          %s2316 = sadd.s32 %s27, %s2315
          %s2317 = smul.addr %s2316, 8
          %s2318 = scalar_lea.hbm %s5, %s2317
          %s2319 = sshll.u32 %s2309, 4
          %s2320 = int_to_ptr.vmem [resolvable:$true] %s2319
          %s2321 = sshll.u32 %s2318, 4
          %s2322 = int_to_ptr.hbm [resolvable:$true] %s2321
          %2327 = dma.vmem_to_hbm [thread:$0]  %s2320, 256, %s2322, %s2306, 128, 512, 8
        $region48: #{tpu_custom_call.1} parent=39 // pred_fallthru
          _
      $region40: #{tpu_custom_call.1} parent=5 // pred_fallthru
        _
      %p2328 = scmp.le.s32.totalorder 2, %s17
      // Predicated region
      $region49: #{tpu_custom_call.1} parent=5 // pred_check
        %p2329 = pneg %p2328
      $region50: #{tpu_custom_call.1} parent=5 // pred_check_branch
        %2331 = sbr.rel (%p2329) target = $region52
      $region51: #{tpu_custom_call.1} parent=5 // pred_region
        %s2332 = ssub.s32 %s17, 2
        // Predicated region
        $region53: #{tpu_custom_call.1} parent=51 // pred_check
          %p2333 = pneg %p172
        $region54: #{tpu_custom_call.1} parent=51 // pred_check_branch
          %2335 = sbr.rel (%p2333) target = $region56
        $region55: #{tpu_custom_call.1} parent=51 // pred_region
          %s2336 = sand.u32 %s157, 1
          %s2337 = scalar_lea.sflag [#allocation4], %s2336
          %s2338 = sand.u32 %s157, 1
          %s2339 = smul.addr %s2338, 16
          %s2340 = scalar_lea.vmem [#allocation5], %s2339
          %2342 = dma.done %s2337, 256
        $region56: #{tpu_custom_call.1} parent=51 // pred_fallthru
          _
      $region52: #{tpu_custom_call.1} parent=5 // pred_fallthru
        _
    $region6: #{tpu_custom_call.1} parent=1 // loop_footer
      %s21 = sadd.s32 1, %s17
    $region7: #{tpu_custom_call.1} parent=1 // loop_footer_branch
      %16 = sbr.rel target = $region3
    $region8: #{tpu_custom_call.1} parent=1 // loop_exit
      _
    %2343 = vsyncpa [#allocation3], 1
    %s2344 = scalar_lea.sflag [#allocation3], 1
    %2345 = vsyncpa %s2344, 1
    %2346 = vsyncpa [#allocation4], 1
    %s2347 = scalar_lea.sflag [#allocation4], 1
    %2348 = vsyncpa %s2347, 1

</llo_original>
